<compile_context>
chip_gen: v7x
topology: tpu7x:2x2x1
jax: 0.10.0
libtpu: 0.0.40
codegen_flags: <defaults>
</compile_context>

<pallas_src>
import functools

import jax
import jax.numpy as jnp
from jax.experimental import pallas as pl
from jax.experimental.pallas import tpu as pltpu


# ----------------------------------------------------------------------------
# Fused kernel: lane-dense 3x3 'same' conv (roll-based taps) + streamed L1 mean
# ----------------------------------------------------------------------------
def _geo_conv3x3_l1_kernel(w_ref, x_ref, loss_ref, vacc_ref, *,
                           cin, cout, h, w, inv_count):
    # w_ref   : SMEM (cout*cin*9,) f32  -- delta weight, PyTorch (O,I,kh,kw) order
    # x_ref   : VMEM (ib, cin, h*w) f32 -- image block, spatial plane on lanes
    # loss_ref: SMEM (1, 1) f32         -- scalar output (resident across grid)
    # vacc_ref: VMEM (ib, h*w) f32      -- per-lane |.| accumulator (resident)
    step = pl.program_id(0)
    ib = x_ref.shape[0]
    hw = h * w

    # Per-tap validity masks: halo handled in-kernel, no host-side pad.
    # Tap (a, b) at output q needs input (row+a-1, col+b-1) inside the image.
    q = jax.lax.broadcasted_iota(jnp.int32, (1, hw), 1)
    col = q % w
    row_ok = [q >= w, None, q < (h - 1) * w]            # a = 0, 1, 2
    col_ok = [col >= 1, None, col <= (w - 2)]           # b = 0, 1, 2

    def tap_mask(a, b):
        ms = [m for m in (row_ok[a], col_ok[b]) if m is not None]
        if not ms:
            return None                                  # center tap: always valid
        mb = ms[0]
        for m in ms[1:]:
            mb = jnp.logical_and(mb, m)
        return jnp.where(mb, jnp.float32(1.0), jnp.float32(0.0))

    masks = [[tap_mask(a, b) for b in range(3)] for a in range(3)]

    # 9-tap conv: shifted planes built ONCE per (block, ci), reused for all co.
    accs = [jnp.zeros((ib, hw), jnp.float32) for _ in range(cout)]
    for ci in range(cin):
        plane = x_ref[:, ci, :]                          # (ib, hw), lane-dense
        taps = []
        for a in range(3):
            for b in range(3):
                s = (a - 1) * w + (b - 1)                # tap == pure lane shift
                t = plane if s == 0 else pltpu.roll(plane, (-s) % hw, axis=1)
                m = masks[a][b]
                taps.append(t if m is None else t * m)   # (1,hw) mask broadcasts
        for co in range(cout):
            acc = accs[co]
            base = (co * cin + ci) * 9
            for tix in range(9):
                acc = acc + w_ref[base + tix] * taps[tix]
            accs[co] = acc

    partial = jnp.abs(accs[0])
    for co in range(1, cout):
        partial = partial + jnp.abs(accs[co])

    @pl.when(step == 0)
    def _init():
        vacc_ref[...] = jnp.zeros_like(vacc_ref)
        loss_ref[0, 0] = jnp.float32(0.0)

    vacc_ref[...] += partial

    @pl.when(step == pl.num_programs(0) - 1)
    def _finalize():
        loss_ref[0, 0] = jnp.sum(vacc_ref[...]) * jnp.float32(inv_count)


def _pick_image_block(n, c, hw, cout):
    """Largest divisor of n that keeps accumulators + taps in vregs and the
    double-buffered block well inside VMEM (no >=2-step requirement)."""
    lane_tiles = -(-hw // 128)
    best = 1
    for d in range(1, n + 1):
        if n % d:
            continue
        sub_tiles = -(-d // 8)
        live_vregs = (cout + 11) * sub_tiles * lane_tiles
        blk_bytes = d * (-(-c // 8) * 8) * lane_tiles * 128 * 4
        if live_vregs <= 48 and 2 * blk_bytes <= 24 * 1024 * 1024:
            best = d
    return best


def geo_conv3x3_abs_mean(x, delta_w):
    """mean over (N, Cout, H, W) of |conv2d_3x3(x, delta_w, bias=0)|, fused."""
    n, c, h, w = x.shape
    cout, cin, kh, kw = delta_w.shape
    assert (cin, kh, kw) == (c, 3, 3)
    hw = h * w

    xf = x.astype(jnp.float32).reshape(n, c, hw)         # free reshape, NO pad
    wf = delta_w.astype(jnp.float32).reshape(-1)         # SMEM scalar table

    ib = _pick_image_block(n, c, hw, cout)
    grid = (n // ib,)

    # Tile-padded VMEM budget (double-buffered input block + resident scratch),
    # capped well under v7x's 64 MiB physical VMEM.
    lane_bytes = (-(-hw // 128)) * 128 * 4
    in_blk = ib * (-(-c // 8) * 8) * lane_bytes
    scratch = (-(-ib // 8) * 8) * lane_bytes
    vmem_limit = min(48 * 1024 * 1024,
                     max(16 * 1024 * 1024, 3 * in_blk + 2 * scratch))

    kernel = functools.partial(
        _geo_conv3x3_l1_kernel, cin=c, cout=cout, h=h, w=w,
        inv_count=1.0 / float(n * cout * h * w))

    loss = pl.pallas_call(
        kernel,
        out_shape=jax.ShapeDtypeStruct((1, 1), jnp.float32),
        grid=grid,
        in_specs=[
            pl.BlockSpec(memory_space=pltpu.MemorySpace.SMEM),       # delta W
            pl.BlockSpec((ib, c, hw), lambda i: (i, 0, 0)),          # images
        ],
        out_specs=pl.BlockSpec(memory_space=pltpu.MemorySpace.SMEM),
        scratch_shapes=[pltpu.VMEM((ib, hw), jnp.float32)],
        compiler_params=pltpu.CompilerParams(
            dimension_semantics=("arbitrary",),                      # reduction
            vmem_limit_bytes=int(vmem_limit),
        ),
    )(wf, xf)
    return loss[0, 0]


# ----------------------------------------------------------------------------
# GeoLoss forward (m = Conv2d(C, C, 3, padding=1), criterion = L1Loss(mean))
# ----------------------------------------------------------------------------
def _ensemble_weight(weight, flip_dir):
    """Exact equivalent kernel of the 8-way geometric ensemble of a 3x3 conv:
    rot^{-i}(conv(rot^i(x), W)) == conv(x, rot90(W, -i, axes=(2,3)));
    the image flip maps to a flip of the kernel along the same spatial axis."""
    if flip_dir == "h":
        k_ax = 3
    elif flip_dir == "v":
        k_ax = 2
    else:
        raise NotImplementedError(flip_dir)
    wf32 = weight.astype(jnp.float32)
    wflip = jnp.flip(wf32, axis=k_ax)
    members = [jnp.rot90(wf32, k=-i, axes=(2, 3)) for i in range(4)]
    members += [jnp.rot90(wflip, k=-i, axes=(2, 3)) for i in range(4)]
    return sum(members) * 0.125


def geo_loss(x, weight, bias, flip_dir="h"):
    """GeoLoss.forward(x, flip_dir).  `bias` cancels exactly in out1 - out2."""
    n, c, h, w = x.shape
    assert h == w, "rot90 ensemble requires square spatial dims"
    del bias  # per-channel bias is invariant under the ensemble -> cancels
    w_ens = _ensemble_weight(weight, flip_dir)
    delta_w = weight.astype(jnp.float32) - w_ens
    return geo_conv3x3_abs_mean(x, delta_w)


# ----------------------------------------------------------------------------
# Pure-XLA reference mirroring the PyTorch module (sanity check in __main__)
# ----------------------------------------------------------------------------
def _conv_ref(x, weight, bias):
    out = jax.lax.conv_general_dilated(
        x, weight, window_strides=(1, 1), padding=((1, 1), (1, 1)),
        dimension_numbers=("NCHW", "OIHW", "NCHW"))
    return out + bias[None, :, None, None]


def _geo_loss_ref(x, weight, bias, flip_dir="h"):
    axis = 3 if flip_dir == "h" else 2
    out1 = _conv_ref(x, weight, bias)
    outs = []
    for i in range(4):
        t = _conv_ref(jnp.rot90(x, k=i, axes=(2, 3)), weight, bias)
        outs.append(jnp.rot90(t, k=-i, axes=(2, 3)))
    for i in range(4):
        xi = jnp.flip(jnp.rot90(x, k=i, axes=(2, 3)), axis=axis)
        t = _conv_ref(xi, weight, bias)
        outs.append(jnp.rot90(jnp.flip(t, axis=axis), k=-i, axes=(2, 3)))
    avg = sum(outs) / 8.0
    return jnp.mean(jnp.abs(out1 - avg))


if __name__ == "__main__":
    key = jax.random.PRNGKey(0)
    k_x, k_w, k_b = jax.random.split(key, 3)

    N, C, H, W = 2, 4, 16, 16
    x = jax.random.normal(k_x, (N, C, H, W), dtype=jnp.float32)

    # Deterministic Conv2d(C, C, 3, padding=1) parameters (synthetic init).
    fan_in = C * 3 * 3
    bound = 1.0 / (fan_in ** 0.5)
    weight = jax.random.uniform(k_w, (C, C, 3, 3), jnp.float32, -bound, bound)
    bias = jax.random.uniform(k_b, (C,), jnp.float32, -bound, bound)

    geo_loss_fn = jax.jit(geo_loss, static_argnames=("flip_dir",))

    for fd in ("h", "v"):
        loss = geo_loss_fn(x, weight, bias, flip_dir=fd)
        jax.block_until_ready(loss)
        ref = _geo_loss_ref(x, weight, bias, fd)
        assert loss.shape == () and bool(jnp.isfinite(loss))
        assert abs(float(loss) - float(ref)) <= 1e-4 + 1e-3 * abs(float(ref)), (
            fd, float(loss), float(ref))
    print("KERNEL_OK")
</pallas_src>

<mosaic_0001>
module attributes {stable_mosaic.version = 11 : i64} {
  func.func @_geo_conv3x3_l1_kernel(%arg0: i32, %arg1: memref<144xf32, #tpu.memory_space<smem>>, %arg2: memref<2x4x256xf32, #tpu.memory_space<vmem>>, %arg3: memref<1x1xf32, #tpu.memory_space<smem>>, %arg4: memref<2x256xf32, #tpu.memory_space<vmem>>) attributes {dimension_semantics = [#tpu.dimension_semantics<arbitrary>], iteration_bounds = array<i64: 1>, scalar_prefetch = 0 : i64, scratch_operands = 1 : i64, tpu.core_type = #tpu.core_type<tc>, window_params = [{transform_indices = @transform_0, window_bounds = array<i64: 144>}, {transform_indices = @transform_1, window_bounds = array<i64: 2, 4, 256>}, {transform_indices = @transform_2, window_bounds = array<i64: 1, 1>}]} {
    %0 = tpu.iota {dimensions = array<i32: 1>} : vector<1x256xi32>
    %c16_i32 = arith.constant 16 : i32
    %c0_i32 = arith.constant 0 : i32
    %1 = arith.cmpi eq, %c16_i32, %c0_i32 : i32
    %c1_i32 = arith.constant 1 : i32
    %2 = arith.select %1, %c1_i32, %c16_i32 : i32
    %3 = vector.broadcast %2 : i32 to vector<1x256xi32>
    %4 = arith.remsi %0, %3 : vector<1x256xi32>
    %c0_i32_0 = arith.constant 0 : i32
    %5 = vector.broadcast %c0_i32_0 : i32 to vector<1x256xi32>
    %6 = arith.cmpi ne, %4, %5 : vector<1x256xi32>
    %c0_i32_1 = arith.constant 0 : i32
    %7 = vector.broadcast %c0_i32_1 : i32 to vector<1x256xi32>
    %8 = arith.cmpi slt, %4, %7 : vector<1x256xi32>
    %c0_i32_2 = arith.constant 0 : i32
    %9 = arith.cmpi slt, %2, %c0_i32_2 : i32
    %10 = vector.broadcast %9 : i1 to vector<1x256xi1>
    %11 = vector.broadcast %10 : vector<1x256xi1> to vector<1x256xi1>
    %12 = arith.xori %8, %11 : vector<1x256xi1>
    %13 = arith.andi %12, %6 : vector<1x256xi1>
    %14 = vector.broadcast %2 : i32 to vector<1x256xi32>
    %15 = arith.addi %4, %14 : vector<1x256xi32>
    %16 = arith.select %13, %15, %4 : vector<1x256xi1>, vector<1x256xi32>
    %c16_i32_3 = arith.constant 16 : i32
    %17 = vector.broadcast %c16_i32_3 : i32 to vector<1x256xi32>
    %18 = arith.cmpi sge, %0, %17 : vector<1x256xi32>
    %c240_i32 = arith.constant 240 : i32
    %19 = vector.broadcast %c240_i32 : i32 to vector<1x256xi32>
    %20 = arith.cmpi slt, %0, %19 : vector<1x256xi32>
    %c1_i32_4 = arith.constant 1 : i32
    %21 = vector.broadcast %c1_i32_4 : i32 to vector<1x256xi32>
    %22 = arith.cmpi sge, %16, %21 : vector<1x256xi32>
    %c14_i32 = arith.constant 14 : i32
    %23 = vector.broadcast %c14_i32 : i32 to vector<1x256xi32>
    %24 = arith.cmpi sle, %16, %23 : vector<1x256xi32>
    %25 = arith.andi %18, %22 : vector<1x256xi1>
    %cst = arith.constant 1.000000e+00 : f32
    %cst_5 = arith.constant 0.000000e+00 : f32
    %26 = vector.broadcast %cst : f32 to vector<1x256xf32>
    %27 = vector.broadcast %cst_5 : f32 to vector<1x256xf32>
    %28 = arith.select %25, %26, %27 : vector<1x256xi1>, vector<1x256xf32>
    %cst_6 = arith.constant 1.000000e+00 : f32
    %cst_7 = arith.constant 0.000000e+00 : f32
    %29 = vector.broadcast %cst_6 : f32 to vector<1x256xf32>
    %30 = vector.broadcast %cst_7 : f32 to vector<1x256xf32>
    %31 = arith.select %18, %29, %30 : vector<1x256xi1>, vector<1x256xf32>
    %32 = arith.andi %18, %24 : vector<1x256xi1>
    %cst_8 = arith.constant 1.000000e+00 : f32
    %cst_9 = arith.constant 0.000000e+00 : f32
    %33 = vector.broadcast %cst_8 : f32 to vector<1x256xf32>
    %34 = vector.broadcast %cst_9 : f32 to vector<1x256xf32>
    %35 = arith.select %32, %33, %34 : vector<1x256xi1>, vector<1x256xf32>
    %cst_10 = arith.constant 1.000000e+00 : f32
    %cst_11 = arith.constant 0.000000e+00 : f32
    %36 = vector.broadcast %cst_10 : f32 to vector<1x256xf32>
    %37 = vector.broadcast %cst_11 : f32 to vector<1x256xf32>
    %38 = arith.select %22, %36, %37 : vector<1x256xi1>, vector<1x256xf32>
    %cst_12 = arith.constant 1.000000e+00 : f32
    %cst_13 = arith.constant 0.000000e+00 : f32
    %39 = vector.broadcast %cst_12 : f32 to vector<1x256xf32>
    %40 = vector.broadcast %cst_13 : f32 to vector<1x256xf32>
    %41 = arith.select %24, %39, %40 : vector<1x256xi1>, vector<1x256xf32>
    %42 = arith.andi %20, %22 : vector<1x256xi1>
    %cst_14 = arith.constant 1.000000e+00 : f32
    %cst_15 = arith.constant 0.000000e+00 : f32
    %43 = vector.broadcast %cst_14 : f32 to vector<1x256xf32>
    %44 = vector.broadcast %cst_15 : f32 to vector<1x256xf32>
    %45 = arith.select %42, %43, %44 : vector<1x256xi1>, vector<1x256xf32>
    %cst_16 = arith.constant 1.000000e+00 : f32
    %cst_17 = arith.constant 0.000000e+00 : f32
    %46 = vector.broadcast %cst_16 : f32 to vector<1x256xf32>
    %47 = vector.broadcast %cst_17 : f32 to vector<1x256xf32>
    %48 = arith.select %20, %46, %47 : vector<1x256xi1>, vector<1x256xf32>
    %49 = arith.andi %20, %24 : vector<1x256xi1>
    %cst_18 = arith.constant 1.000000e+00 : f32
    %cst_19 = arith.constant 0.000000e+00 : f32
    %50 = vector.broadcast %cst_18 : f32 to vector<1x256xf32>
    %51 = vector.broadcast %cst_19 : f32 to vector<1x256xf32>
    %52 = arith.select %49, %50, %51 : vector<1x256xi1>, vector<1x256xf32>
    %cst_20 = arith.constant 0.000000e+00 : f32
    %53 = vector.broadcast %cst_20 : f32 to vector<2x256xf32>
    %cst_21 = arith.constant 0.000000e+00 : f32
    %54 = vector.broadcast %cst_21 : f32 to vector<2x256xf32>
    %cst_22 = arith.constant 0.000000e+00 : f32
    %55 = vector.broadcast %cst_22 : f32 to vector<2x256xf32>
    %cst_23 = arith.constant 0.000000e+00 : f32
    %56 = vector.broadcast %cst_23 : f32 to vector<2x256xf32>
    %c0 = arith.constant 0 : index
    %c0_24 = arith.constant 0 : index
    %c0_25 = arith.constant 0 : index
    %57 = vector.load %arg2[%c0, %c0_24, %c0_25] : memref<2x4x256xf32, #tpu.memory_space<vmem>>, vector<2x1x256xf32>
    %58 = vector.shape_cast %57 : vector<2x1x256xf32> to vector<2x256xf32>
    %c17_i32 = arith.constant 17 : i32
    %59 = tpu.dynamic_rotate %58 by %c17_i32 dim 1 : vector<2x256xf32>, i32 -> vector<2x256xf32>
    %60 = vector.broadcast %28 : vector<1x256xf32> to vector<2x256xf32>
    %61 = arith.mulf %59, %60 : vector<2x256xf32>
    %c16_i32_26 = arith.constant 16 : i32
    %62 = tpu.dynamic_rotate %58 by %c16_i32_26 dim 1 : vector<2x256xf32>, i32 -> vector<2x256xf32>
    %63 = vector.broadcast %31 : vector<1x256xf32> to vector<2x256xf32>
    %64 = arith.mulf %62, %63 : vector<2x256xf32>
    %c15_i32 = arith.constant 15 : i32
    %65 = tpu.dynamic_rotate %58 by %c15_i32 dim 1 : vector<2x256xf32>, i32 -> vector<2x256xf32>
    %66 = vector.broadcast %35 : vector<1x256xf32> to vector<2x256xf32>
    %67 = arith.mulf %65, %66 : vector<2x256xf32>
    %c1_i32_27 = arith.constant 1 : i32
    %68 = tpu.dynamic_rotate %58 by %c1_i32_27 dim 1 : vector<2x256xf32>, i32 -> vector<2x256xf32>
    %69 = vector.broadcast %38 : vector<1x256xf32> to vector<2x256xf32>
    %70 = arith.mulf %68, %69 : vector<2x256xf32>
    %c255_i32 = arith.constant 255 : i32
    %71 = tpu.dynamic_rotate %58 by %c255_i32 dim 1 : vector<2x256xf32>, i32 -> vector<2x256xf32>
    %72 = vector.broadcast %41 : vector<1x256xf32> to vector<2x256xf32>
    %73 = arith.mulf %71, %72 : vector<2x256xf32>
    %c241_i32 = arith.constant 241 : i32
    %74 = tpu.dynamic_rotate %58 by %c241_i32 dim 1 : vector<2x256xf32>, i32 -> vector<2x256xf32>
    %75 = vector.broadcast %45 : vector<1x256xf32> to vector<2x256xf32>
    %76 = arith.mulf %74, %75 : vector<2x256xf32>
    %c240_i32_28 = arith.constant 240 : i32
    %77 = tpu.dynamic_rotate %58 by %c240_i32_28 dim 1 : vector<2x256xf32>, i32 -> vector<2x256xf32>
    %78 = vector.broadcast %48 : vector<1x256xf32> to vector<2x256xf32>
    %79 = arith.mulf %77, %78 : vector<2x256xf32>
    %c239_i32 = arith.constant 239 : i32
    %80 = tpu.dynamic_rotate %58 by %c239_i32 dim 1 : vector<2x256xf32>, i32 -> vector<2x256xf32>
    %81 = vector.broadcast %52 : vector<1x256xf32> to vector<2x256xf32>
    %82 = arith.mulf %80, %81 : vector<2x256xf32>
    %c0_29 = arith.constant 0 : index
    %83 = memref.load %arg1[%c0_29] : memref<144xf32, #tpu.memory_space<smem>>
    %84 = vector.broadcast %83 : f32 to vector<2x256xf32>
    %85 = arith.mulf %84, %61 : vector<2x256xf32>
    %86 = arith.addf %53, %85 : vector<2x256xf32>
    %c1 = arith.constant 1 : index
    %87 = memref.load %arg1[%c1] : memref<144xf32, #tpu.memory_space<smem>>
    %88 = vector.broadcast %87 : f32 to vector<2x256xf32>
    %89 = arith.mulf %88, %64 : vector<2x256xf32>
    %90 = arith.addf %86, %89 : vector<2x256xf32>
    %c2 = arith.constant 2 : index
    %91 = memref.load %arg1[%c2] : memref<144xf32, #tpu.memory_space<smem>>
    %92 = vector.broadcast %91 : f32 to vector<2x256xf32>
    %93 = arith.mulf %92, %67 : vector<2x256xf32>
    %94 = arith.addf %90, %93 : vector<2x256xf32>
    %c3 = arith.constant 3 : index
    %95 = memref.load %arg1[%c3] : memref<144xf32, #tpu.memory_space<smem>>
    %96 = vector.broadcast %95 : f32 to vector<2x256xf32>
    %97 = arith.mulf %96, %70 : vector<2x256xf32>
    %98 = arith.addf %94, %97 : vector<2x256xf32>
    %c4 = arith.constant 4 : index
    %99 = memref.load %arg1[%c4] : memref<144xf32, #tpu.memory_space<smem>>
    %100 = vector.broadcast %99 : f32 to vector<2x256xf32>
    %101 = arith.mulf %100, %58 : vector<2x256xf32>
    %102 = arith.addf %98, %101 : vector<2x256xf32>
    %c5 = arith.constant 5 : index
    %103 = memref.load %arg1[%c5] : memref<144xf32, #tpu.memory_space<smem>>
    %104 = vector.broadcast %103 : f32 to vector<2x256xf32>
    %105 = arith.mulf %104, %73 : vector<2x256xf32>
    %106 = arith.addf %102, %105 : vector<2x256xf32>
    %c6 = arith.constant 6 : index
    %107 = memref.load %arg1[%c6] : memref<144xf32, #tpu.memory_space<smem>>
    %108 = vector.broadcast %107 : f32 to vector<2x256xf32>
    %109 = arith.mulf %108, %76 : vector<2x256xf32>
    %110 = arith.addf %106, %109 : vector<2x256xf32>
    %c7 = arith.constant 7 : index
    %111 = memref.load %arg1[%c7] : memref<144xf32, #tpu.memory_space<smem>>
    %112 = vector.broadcast %111 : f32 to vector<2x256xf32>
    %113 = arith.mulf %112, %79 : vector<2x256xf32>
    %114 = arith.addf %110, %113 : vector<2x256xf32>
    %c8 = arith.constant 8 : index
    %115 = memref.load %arg1[%c8] : memref<144xf32, #tpu.memory_space<smem>>
    %116 = vector.broadcast %115 : f32 to vector<2x256xf32>
    %117 = arith.mulf %116, %82 : vector<2x256xf32>
    %118 = arith.addf %114, %117 : vector<2x256xf32>
    %c36 = arith.constant 36 : index
    %119 = memref.load %arg1[%c36] : memref<144xf32, #tpu.memory_space<smem>>
    %120 = vector.broadcast %119 : f32 to vector<2x256xf32>
    %121 = arith.mulf %120, %61 : vector<2x256xf32>
    %122 = arith.addf %54, %121 : vector<2x256xf32>
    %c37 = arith.constant 37 : index
    %123 = memref.load %arg1[%c37] : memref<144xf32, #tpu.memory_space<smem>>
    %124 = vector.broadcast %123 : f32 to vector<2x256xf32>
    %125 = arith.mulf %124, %64 : vector<2x256xf32>
    %126 = arith.addf %122, %125 : vector<2x256xf32>
    %c38 = arith.constant 38 : index
    %127 = memref.load %arg1[%c38] : memref<144xf32, #tpu.memory_space<smem>>
    %128 = vector.broadcast %127 : f32 to vector<2x256xf32>
    %129 = arith.mulf %128, %67 : vector<2x256xf32>
    %130 = arith.addf %126, %129 : vector<2x256xf32>
    %c39 = arith.constant 39 : index
    %131 = memref.load %arg1[%c39] : memref<144xf32, #tpu.memory_space<smem>>
    %132 = vector.broadcast %131 : f32 to vector<2x256xf32>
    %133 = arith.mulf %132, %70 : vector<2x256xf32>
    %134 = arith.addf %130, %133 : vector<2x256xf32>
    %c40 = arith.constant 40 : index
    %135 = memref.load %arg1[%c40] : memref<144xf32, #tpu.memory_space<smem>>
    %136 = vector.broadcast %135 : f32 to vector<2x256xf32>
    %137 = arith.mulf %136, %58 : vector<2x256xf32>
    %138 = arith.addf %134, %137 : vector<2x256xf32>
    %c41 = arith.constant 41 : index
    %139 = memref.load %arg1[%c41] : memref<144xf32, #tpu.memory_space<smem>>
    %140 = vector.broadcast %139 : f32 to vector<2x256xf32>
    %141 = arith.mulf %140, %73 : vector<2x256xf32>
    %142 = arith.addf %138, %141 : vector<2x256xf32>
    %c42 = arith.constant 42 : index
    %143 = memref.load %arg1[%c42] : memref<144xf32, #tpu.memory_space<smem>>
    %144 = vector.broadcast %143 : f32 to vector<2x256xf32>
    %145 = arith.mulf %144, %76 : vector<2x256xf32>
    %146 = arith.addf %142, %145 : vector<2x256xf32>
    %c43 = arith.constant 43 : index
    %147 = memref.load %arg1[%c43] : memref<144xf32, #tpu.memory_space<smem>>
    %148 = vector.broadcast %147 : f32 to vector<2x256xf32>
    %149 = arith.mulf %148, %79 : vector<2x256xf32>
    %150 = arith.addf %146, %149 : vector<2x256xf32>
    %c44 = arith.constant 44 : index
    %151 = memref.load %arg1[%c44] : memref<144xf32, #tpu.memory_space<smem>>
    %152 = vector.broadcast %151 : f32 to vector<2x256xf32>
    %153 = arith.mulf %152, %82 : vector<2x256xf32>
    %154 = arith.addf %150, %153 : vector<2x256xf32>
    %c72 = arith.constant 72 : index
    %155 = memref.load %arg1[%c72] : memref<144xf32, #tpu.memory_space<smem>>
    %156 = vector.broadcast %155 : f32 to vector<2x256xf32>
    %157 = arith.mulf %156, %61 : vector<2x256xf32>
    %158 = arith.addf %55, %157 : vector<2x256xf32>
    %c73 = arith.constant 73 : index
    %159 = memref.load %arg1[%c73] : memref<144xf32, #tpu.memory_space<smem>>
    %160 = vector.broadcast %159 : f32 to vector<2x256xf32>
    %161 = arith.mulf %160, %64 : vector<2x256xf32>
    %162 = arith.addf %158, %161 : vector<2x256xf32>
    %c74 = arith.constant 74 : index
    %163 = memref.load %arg1[%c74] : memref<144xf32, #tpu.memory_space<smem>>
    %164 = vector.broadcast %163 : f32 to vector<2x256xf32>
    %165 = arith.mulf %164, %67 : vector<2x256xf32>
    %166 = arith.addf %162, %165 : vector<2x256xf32>
    %c75 = arith.constant 75 : index
    %167 = memref.load %arg1[%c75] : memref<144xf32, #tpu.memory_space<smem>>
    %168 = vector.broadcast %167 : f32 to vector<2x256xf32>
    %169 = arith.mulf %168, %70 : vector<2x256xf32>
    %170 = arith.addf %166, %169 : vector<2x256xf32>
    %c76 = arith.constant 76 : index
    %171 = memref.load %arg1[%c76] : memref<144xf32, #tpu.memory_space<smem>>
    %172 = vector.broadcast %171 : f32 to vector<2x256xf32>
    %173 = arith.mulf %172, %58 : vector<2x256xf32>
    %174 = arith.addf %170, %173 : vector<2x256xf32>
    %c77 = arith.constant 77 : index
    %175 = memref.load %arg1[%c77] : memref<144xf32, #tpu.memory_space<smem>>
    %176 = vector.broadcast %175 : f32 to vector<2x256xf32>
    %177 = arith.mulf %176, %73 : vector<2x256xf32>
    %178 = arith.addf %174, %177 : vector<2x256xf32>
    %c78 = arith.constant 78 : index
    %179 = memref.load %arg1[%c78] : memref<144xf32, #tpu.memory_space<smem>>
    %180 = vector.broadcast %179 : f32 to vector<2x256xf32>
    %181 = arith.mulf %180, %76 : vector<2x256xf32>
    %182 = arith.addf %178, %181 : vector<2x256xf32>
    %c79 = arith.constant 79 : index
    %183 = memref.load %arg1[%c79] : memref<144xf32, #tpu.memory_space<smem>>
    %184 = vector.broadcast %183 : f32 to vector<2x256xf32>
    %185 = arith.mulf %184, %79 : vector<2x256xf32>
    %186 = arith.addf %182, %185 : vector<2x256xf32>
    %c80 = arith.constant 80 : index
    %187 = memref.load %arg1[%c80] : memref<144xf32, #tpu.memory_space<smem>>
    %188 = vector.broadcast %187 : f32 to vector<2x256xf32>
    %189 = arith.mulf %188, %82 : vector<2x256xf32>
    %190 = arith.addf %186, %189 : vector<2x256xf32>
    %c108 = arith.constant 108 : index
    %191 = memref.load %arg1[%c108] : memref<144xf32, #tpu.memory_space<smem>>
    %192 = vector.broadcast %191 : f32 to vector<2x256xf32>
    %193 = arith.mulf %192, %61 : vector<2x256xf32>
    %194 = arith.addf %56, %193 : vector<2x256xf32>
    %c109 = arith.constant 109 : index
    %195 = memref.load %arg1[%c109] : memref<144xf32, #tpu.memory_space<smem>>
    %196 = vector.broadcast %195 : f32 to vector<2x256xf32>
    %197 = arith.mulf %196, %64 : vector<2x256xf32>
    %198 = arith.addf %194, %197 : vector<2x256xf32>
    %c110 = arith.constant 110 : index
    %199 = memref.load %arg1[%c110] : memref<144xf32, #tpu.memory_space<smem>>
    %200 = vector.broadcast %199 : f32 to vector<2x256xf32>
    %201 = arith.mulf %200, %67 : vector<2x256xf32>
    %202 = arith.addf %198, %201 : vector<2x256xf32>
    %c111 = arith.constant 111 : index
    %203 = memref.load %arg1[%c111] : memref<144xf32, #tpu.memory_space<smem>>
    %204 = vector.broadcast %203 : f32 to vector<2x256xf32>
    %205 = arith.mulf %204, %70 : vector<2x256xf32>
    %206 = arith.addf %202, %205 : vector<2x256xf32>
    %c112 = arith.constant 112 : index
    %207 = memref.load %arg1[%c112] : memref<144xf32, #tpu.memory_space<smem>>
    %208 = vector.broadcast %207 : f32 to vector<2x256xf32>
    %209 = arith.mulf %208, %58 : vector<2x256xf32>
    %210 = arith.addf %206, %209 : vector<2x256xf32>
    %c113 = arith.constant 113 : index
    %211 = memref.load %arg1[%c113] : memref<144xf32, #tpu.memory_space<smem>>
    %212 = vector.broadcast %211 : f32 to vector<2x256xf32>
    %213 = arith.mulf %212, %73 : vector<2x256xf32>
    %214 = arith.addf %210, %213 : vector<2x256xf32>
    %c114 = arith.constant 114 : index
    %215 = memref.load %arg1[%c114] : memref<144xf32, #tpu.memory_space<smem>>
    %216 = vector.broadcast %215 : f32 to vector<2x256xf32>
    %217 = arith.mulf %216, %76 : vector<2x256xf32>
    %218 = arith.addf %214, %217 : vector<2x256xf32>
    %c115 = arith.constant 115 : index
    %219 = memref.load %arg1[%c115] : memref<144xf32, #tpu.memory_space<smem>>
    %220 = vector.broadcast %219 : f32 to vector<2x256xf32>
    %221 = arith.mulf %220, %79 : vector<2x256xf32>
    %222 = arith.addf %218, %221 : vector<2x256xf32>
    %c116 = arith.constant 116 : index
    %223 = memref.load %arg1[%c116] : memref<144xf32, #tpu.memory_space<smem>>
    %224 = vector.broadcast %223 : f32 to vector<2x256xf32>
    %225 = arith.mulf %224, %82 : vector<2x256xf32>
    %226 = arith.addf %222, %225 : vector<2x256xf32>
    %c0_30 = arith.constant 0 : index
    %c1_31 = arith.constant 1 : index
    %c0_32 = arith.constant 0 : index
    %227 = vector.load %arg2[%c0_30, %c1_31, %c0_32] : memref<2x4x256xf32, #tpu.memory_space<vmem>>, vector<2x1x256xf32>
    %228 = vector.shape_cast %227 : vector<2x1x256xf32> to vector<2x256xf32>
    %c17_i32_33 = arith.constant 17 : i32
    %229 = tpu.dynamic_rotate %228 by %c17_i32_33 dim 1 : vector<2x256xf32>, i32 -> vector<2x256xf32>
    %230 = vector.broadcast %28 : vector<1x256xf32> to vector<2x256xf32>
    %231 = arith.mulf %229, %230 : vector<2x256xf32>
    %c16_i32_34 = arith.constant 16 : i32
    %232 = tpu.dynamic_rotate %228 by %c16_i32_34 dim 1 : vector<2x256xf32>, i32 -> vector<2x256xf32>
    %233 = vector.broadcast %31 : vector<1x256xf32> to vector<2x256xf32>
    %234 = arith.mulf %232, %233 : vector<2x256xf32>
    %c15_i32_35 = arith.constant 15 : i32
    %235 = tpu.dynamic_rotate %228 by %c15_i32_35 dim 1 : vector<2x256xf32>, i32 -> vector<2x256xf32>
    %236 = vector.broadcast %35 : vector<1x256xf32> to vector<2x256xf32>
    %237 = arith.mulf %235, %236 : vector<2x256xf32>
    %c1_i32_36 = arith.constant 1 : i32
    %238 = tpu.dynamic_rotate %228 by %c1_i32_36 dim 1 : vector<2x256xf32>, i32 -> vector<2x256xf32>
    %239 = vector.broadcast %38 : vector<1x256xf32> to vector<2x256xf32>
    %240 = arith.mulf %238, %239 : vector<2x256xf32>
    %c255_i32_37 = arith.constant 255 : i32
    %241 = tpu.dynamic_rotate %228 by %c255_i32_37 dim 1 : vector<2x256xf32>, i32 -> vector<2x256xf32>
    %242 = vector.broadcast %41 : vector<1x256xf32> to vector<2x256xf32>
    %243 = arith.mulf %241, %242 : vector<2x256xf32>
    %c241_i32_38 = arith.constant 241 : i32
    %244 = tpu.dynamic_rotate %228 by %c241_i32_38 dim 1 : vector<2x256xf32>, i32 -> vector<2x256xf32>
    %245 = vector.broadcast %45 : vector<1x256xf32> to vector<2x256xf32>
    %246 = arith.mulf %244, %245 : vector<2x256xf32>
    %c240_i32_39 = arith.constant 240 : i32
    %247 = tpu.dynamic_rotate %228 by %c240_i32_39 dim 1 : vector<2x256xf32>, i32 -> vector<2x256xf32>
    %248 = vector.broadcast %48 : vector<1x256xf32> to vector<2x256xf32>
    %249 = arith.mulf %247, %248 : vector<2x256xf32>
    %c239_i32_40 = arith.constant 239 : i32
    %250 = tpu.dynamic_rotate %228 by %c239_i32_40 dim 1 : vector<2x256xf32>, i32 -> vector<2x256xf32>
    %251 = vector.broadcast %52 : vector<1x256xf32> to vector<2x256xf32>
    %252 = arith.mulf %250, %251 : vector<2x256xf32>
    %c9 = arith.constant 9 : index
    %253 = memref.load %arg1[%c9] : memref<144xf32, #tpu.memory_space<smem>>
    %254 = vector.broadcast %253 : f32 to vector<2x256xf32>
    %255 = arith.mulf %254, %231 : vector<2x256xf32>
    %256 = arith.addf %118, %255 : vector<2x256xf32>
    %c10 = arith.constant 10 : index
    %257 = memref.load %arg1[%c10] : memref<144xf32, #tpu.memory_space<smem>>
    %258 = vector.broadcast %257 : f32 to vector<2x256xf32>
    %259 = arith.mulf %258, %234 : vector<2x256xf32>
    %260 = arith.addf %256, %259 : vector<2x256xf32>
    %c11 = arith.constant 11 : index
    %261 = memref.load %arg1[%c11] : memref<144xf32, #tpu.memory_space<smem>>
    %262 = vector.broadcast %261 : f32 to vector<2x256xf32>
    %263 = arith.mulf %262, %237 : vector<2x256xf32>
    %264 = arith.addf %260, %263 : vector<2x256xf32>
    %c12 = arith.constant 12 : index
    %265 = memref.load %arg1[%c12] : memref<144xf32, #tpu.memory_space<smem>>
    %266 = vector.broadcast %265 : f32 to vector<2x256xf32>
    %267 = arith.mulf %266, %240 : vector<2x256xf32>
    %268 = arith.addf %264, %267 : vector<2x256xf32>
    %c13 = arith.constant 13 : index
    %269 = memref.load %arg1[%c13] : memref<144xf32, #tpu.memory_space<smem>>
    %270 = vector.broadcast %269 : f32 to vector<2x256xf32>
    %271 = arith.mulf %270, %228 : vector<2x256xf32>
    %272 = arith.addf %268, %271 : vector<2x256xf32>
    %c14 = arith.constant 14 : index
    %273 = memref.load %arg1[%c14] : memref<144xf32, #tpu.memory_space<smem>>
    %274 = vector.broadcast %273 : f32 to vector<2x256xf32>
    %275 = arith.mulf %274, %243 : vector<2x256xf32>
    %276 = arith.addf %272, %275 : vector<2x256xf32>
    %c15 = arith.constant 15 : index
    %277 = memref.load %arg1[%c15] : memref<144xf32, #tpu.memory_space<smem>>
    %278 = vector.broadcast %277 : f32 to vector<2x256xf32>
    %279 = arith.mulf %278, %246 : vector<2x256xf32>
    %280 = arith.addf %276, %279 : vector<2x256xf32>
    %c16 = arith.constant 16 : index
    %281 = memref.load %arg1[%c16] : memref<144xf32, #tpu.memory_space<smem>>
    %282 = vector.broadcast %281 : f32 to vector<2x256xf32>
    %283 = arith.mulf %282, %249 : vector<2x256xf32>
    %284 = arith.addf %280, %283 : vector<2x256xf32>
    %c17 = arith.constant 17 : index
    %285 = memref.load %arg1[%c17] : memref<144xf32, #tpu.memory_space<smem>>
    %286 = vector.broadcast %285 : f32 to vector<2x256xf32>
    %287 = arith.mulf %286, %252 : vector<2x256xf32>
    %288 = arith.addf %284, %287 : vector<2x256xf32>
    %c45 = arith.constant 45 : index
    %289 = memref.load %arg1[%c45] : memref<144xf32, #tpu.memory_space<smem>>
    %290 = vector.broadcast %289 : f32 to vector<2x256xf32>
    %291 = arith.mulf %290, %231 : vector<2x256xf32>
    %292 = arith.addf %154, %291 : vector<2x256xf32>
    %c46 = arith.constant 46 : index
    %293 = memref.load %arg1[%c46] : memref<144xf32, #tpu.memory_space<smem>>
    %294 = vector.broadcast %293 : f32 to vector<2x256xf32>
    %295 = arith.mulf %294, %234 : vector<2x256xf32>
    %296 = arith.addf %292, %295 : vector<2x256xf32>
    %c47 = arith.constant 47 : index
    %297 = memref.load %arg1[%c47] : memref<144xf32, #tpu.memory_space<smem>>
    %298 = vector.broadcast %297 : f32 to vector<2x256xf32>
    %299 = arith.mulf %298, %237 : vector<2x256xf32>
    %300 = arith.addf %296, %299 : vector<2x256xf32>
    %c48 = arith.constant 48 : index
    %301 = memref.load %arg1[%c48] : memref<144xf32, #tpu.memory_space<smem>>
    %302 = vector.broadcast %301 : f32 to vector<2x256xf32>
    %303 = arith.mulf %302, %240 : vector<2x256xf32>
    %304 = arith.addf %300, %303 : vector<2x256xf32>
    %c49 = arith.constant 49 : index
    %305 = memref.load %arg1[%c49] : memref<144xf32, #tpu.memory_space<smem>>
    %306 = vector.broadcast %305 : f32 to vector<2x256xf32>
    %307 = arith.mulf %306, %228 : vector<2x256xf32>
    %308 = arith.addf %304, %307 : vector<2x256xf32>
    %c50 = arith.constant 50 : index
    %309 = memref.load %arg1[%c50] : memref<144xf32, #tpu.memory_space<smem>>
    %310 = vector.broadcast %309 : f32 to vector<2x256xf32>
    %311 = arith.mulf %310, %243 : vector<2x256xf32>
    %312 = arith.addf %308, %311 : vector<2x256xf32>
    %c51 = arith.constant 51 : index
    %313 = memref.load %arg1[%c51] : memref<144xf32, #tpu.memory_space<smem>>
    %314 = vector.broadcast %313 : f32 to vector<2x256xf32>
    %315 = arith.mulf %314, %246 : vector<2x256xf32>
    %316 = arith.addf %312, %315 : vector<2x256xf32>
    %c52 = arith.constant 52 : index
    %317 = memref.load %arg1[%c52] : memref<144xf32, #tpu.memory_space<smem>>
    %318 = vector.broadcast %317 : f32 to vector<2x256xf32>
    %319 = arith.mulf %318, %249 : vector<2x256xf32>
    %320 = arith.addf %316, %319 : vector<2x256xf32>
    %c53 = arith.constant 53 : index
    %321 = memref.load %arg1[%c53] : memref<144xf32, #tpu.memory_space<smem>>
    %322 = vector.broadcast %321 : f32 to vector<2x256xf32>
    %323 = arith.mulf %322, %252 : vector<2x256xf32>
    %324 = arith.addf %320, %323 : vector<2x256xf32>
    %c81 = arith.constant 81 : index
    %325 = memref.load %arg1[%c81] : memref<144xf32, #tpu.memory_space<smem>>
    %326 = vector.broadcast %325 : f32 to vector<2x256xf32>
    %327 = arith.mulf %326, %231 : vector<2x256xf32>
    %328 = arith.addf %190, %327 : vector<2x256xf32>
    %c82 = arith.constant 82 : index
    %329 = memref.load %arg1[%c82] : memref<144xf32, #tpu.memory_space<smem>>
    %330 = vector.broadcast %329 : f32 to vector<2x256xf32>
    %331 = arith.mulf %330, %234 : vector<2x256xf32>
    %332 = arith.addf %328, %331 : vector<2x256xf32>
    %c83 = arith.constant 83 : index
    %333 = memref.load %arg1[%c83] : memref<144xf32, #tpu.memory_space<smem>>
    %334 = vector.broadcast %333 : f32 to vector<2x256xf32>
    %335 = arith.mulf %334, %237 : vector<2x256xf32>
    %336 = arith.addf %332, %335 : vector<2x256xf32>
    %c84 = arith.constant 84 : index
    %337 = memref.load %arg1[%c84] : memref<144xf32, #tpu.memory_space<smem>>
    %338 = vector.broadcast %337 : f32 to vector<2x256xf32>
    %339 = arith.mulf %338, %240 : vector<2x256xf32>
    %340 = arith.addf %336, %339 : vector<2x256xf32>
    %c85 = arith.constant 85 : index
    %341 = memref.load %arg1[%c85] : memref<144xf32, #tpu.memory_space<smem>>
    %342 = vector.broadcast %341 : f32 to vector<2x256xf32>
    %343 = arith.mulf %342, %228 : vector<2x256xf32>
    %344 = arith.addf %340, %343 : vector<2x256xf32>
    %c86 = arith.constant 86 : index
    %345 = memref.load %arg1[%c86] : memref<144xf32, #tpu.memory_space<smem>>
    %346 = vector.broadcast %345 : f32 to vector<2x256xf32>
    %347 = arith.mulf %346, %243 : vector<2x256xf32>
    %348 = arith.addf %344, %347 : vector<2x256xf32>
    %c87 = arith.constant 87 : index
    %349 = memref.load %arg1[%c87] : memref<144xf32, #tpu.memory_space<smem>>
    %350 = vector.broadcast %349 : f32 to vector<2x256xf32>
    %351 = arith.mulf %350, %246 : vector<2x256xf32>
    %352 = arith.addf %348, %351 : vector<2x256xf32>
    %c88 = arith.constant 88 : index
    %353 = memref.load %arg1[%c88] : memref<144xf32, #tpu.memory_space<smem>>
    %354 = vector.broadcast %353 : f32 to vector<2x256xf32>
    %355 = arith.mulf %354, %249 : vector<2x256xf32>
    %356 = arith.addf %352, %355 : vector<2x256xf32>
    %c89 = arith.constant 89 : index
    %357 = memref.load %arg1[%c89] : memref<144xf32, #tpu.memory_space<smem>>
    %358 = vector.broadcast %357 : f32 to vector<2x256xf32>
    %359 = arith.mulf %358, %252 : vector<2x256xf32>
    %360 = arith.addf %356, %359 : vector<2x256xf32>
    %c117 = arith.constant 117 : index
    %361 = memref.load %arg1[%c117] : memref<144xf32, #tpu.memory_space<smem>>
    %362 = vector.broadcast %361 : f32 to vector<2x256xf32>
    %363 = arith.mulf %362, %231 : vector<2x256xf32>
    %364 = arith.addf %226, %363 : vector<2x256xf32>
    %c118 = arith.constant 118 : index
    %365 = memref.load %arg1[%c118] : memref<144xf32, #tpu.memory_space<smem>>
    %366 = vector.broadcast %365 : f32 to vector<2x256xf32>
    %367 = arith.mulf %366, %234 : vector<2x256xf32>
    %368 = arith.addf %364, %367 : vector<2x256xf32>
    %c119 = arith.constant 119 : index
    %369 = memref.load %arg1[%c119] : memref<144xf32, #tpu.memory_space<smem>>
    %370 = vector.broadcast %369 : f32 to vector<2x256xf32>
    %371 = arith.mulf %370, %237 : vector<2x256xf32>
    %372 = arith.addf %368, %371 : vector<2x256xf32>
    %c120 = arith.constant 120 : index
    %373 = memref.load %arg1[%c120] : memref<144xf32, #tpu.memory_space<smem>>
    %374 = vector.broadcast %373 : f32 to vector<2x256xf32>
    %375 = arith.mulf %374, %240 : vector<2x256xf32>
    %376 = arith.addf %372, %375 : vector<2x256xf32>
    %c121 = arith.constant 121 : index
    %377 = memref.load %arg1[%c121] : memref<144xf32, #tpu.memory_space<smem>>
    %378 = vector.broadcast %377 : f32 to vector<2x256xf32>
    %379 = arith.mulf %378, %228 : vector<2x256xf32>
    %380 = arith.addf %376, %379 : vector<2x256xf32>
    %c122 = arith.constant 122 : index
    %381 = memref.load %arg1[%c122] : memref<144xf32, #tpu.memory_space<smem>>
    %382 = vector.broadcast %381 : f32 to vector<2x256xf32>
    %383 = arith.mulf %382, %243 : vector<2x256xf32>
    %384 = arith.addf %380, %383 : vector<2x256xf32>
    %c123 = arith.constant 123 : index
    %385 = memref.load %arg1[%c123] : memref<144xf32, #tpu.memory_space<smem>>
    %386 = vector.broadcast %385 : f32 to vector<2x256xf32>
    %387 = arith.mulf %386, %246 : vector<2x256xf32>
    %388 = arith.addf %384, %387 : vector<2x256xf32>
    %c124 = arith.constant 124 : index
    %389 = memref.load %arg1[%c124] : memref<144xf32, #tpu.memory_space<smem>>
    %390 = vector.broadcast %389 : f32 to vector<2x256xf32>
    %391 = arith.mulf %390, %249 : vector<2x256xf32>
    %392 = arith.addf %388, %391 : vector<2x256xf32>
    %c125 = arith.constant 125 : index
    %393 = memref.load %arg1[%c125] : memref<144xf32, #tpu.memory_space<smem>>
    %394 = vector.broadcast %393 : f32 to vector<2x256xf32>
    %395 = arith.mulf %394, %252 : vector<2x256xf32>
    %396 = arith.addf %392, %395 : vector<2x256xf32>
    %c0_41 = arith.constant 0 : index
    %c2_42 = arith.constant 2 : index
    %c0_43 = arith.constant 0 : index
    %397 = vector.load %arg2[%c0_41, %c2_42, %c0_43] : memref<2x4x256xf32, #tpu.memory_space<vmem>>, vector<2x1x256xf32>
    %398 = vector.shape_cast %397 : vector<2x1x256xf32> to vector<2x256xf32>
    %c17_i32_44 = arith.constant 17 : i32
    %399 = tpu.dynamic_rotate %398 by %c17_i32_44 dim 1 : vector<2x256xf32>, i32 -> vector<2x256xf32>
    %400 = vector.broadcast %28 : vector<1x256xf32> to vector<2x256xf32>
    %401 = arith.mulf %399, %400 : vector<2x256xf32>
    %c16_i32_45 = arith.constant 16 : i32
    %402 = tpu.dynamic_rotate %398 by %c16_i32_45 dim 1 : vector<2x256xf32>, i32 -> vector<2x256xf32>
    %403 = vector.broadcast %31 : vector<1x256xf32> to vector<2x256xf32>
    %404 = arith.mulf %402, %403 : vector<2x256xf32>
    %c15_i32_46 = arith.constant 15 : i32
    %405 = tpu.dynamic_rotate %398 by %c15_i32_46 dim 1 : vector<2x256xf32>, i32 -> vector<2x256xf32>
    %406 = vector.broadcast %35 : vector<1x256xf32> to vector<2x256xf32>
    %407 = arith.mulf %405, %406 : vector<2x256xf32>
    %c1_i32_47 = arith.constant 1 : i32
    %408 = tpu.dynamic_rotate %398 by %c1_i32_47 dim 1 : vector<2x256xf32>, i32 -> vector<2x256xf32>
    %409 = vector.broadcast %38 : vector<1x256xf32> to vector<2x256xf32>
    %410 = arith.mulf %408, %409 : vector<2x256xf32>
    %c255_i32_48 = arith.constant 255 : i32
    %411 = tpu.dynamic_rotate %398 by %c255_i32_48 dim 1 : vector<2x256xf32>, i32 -> vector<2x256xf32>
    %412 = vector.broadcast %41 : vector<1x256xf32> to vector<2x256xf32>
    %413 = arith.mulf %411, %412 : vector<2x256xf32>
    %c241_i32_49 = arith.constant 241 : i32
    %414 = tpu.dynamic_rotate %398 by %c241_i32_49 dim 1 : vector<2x256xf32>, i32 -> vector<2x256xf32>
    %415 = vector.broadcast %45 : vector<1x256xf32> to vector<2x256xf32>
    %416 = arith.mulf %414, %415 : vector<2x256xf32>
    %c240_i32_50 = arith.constant 240 : i32
    %417 = tpu.dynamic_rotate %398 by %c240_i32_50 dim 1 : vector<2x256xf32>, i32 -> vector<2x256xf32>
    %418 = vector.broadcast %48 : vector<1x256xf32> to vector<2x256xf32>
    %419 = arith.mulf %417, %418 : vector<2x256xf32>
    %c239_i32_51 = arith.constant 239 : i32
    %420 = tpu.dynamic_rotate %398 by %c239_i32_51 dim 1 : vector<2x256xf32>, i32 -> vector<2x256xf32>
    %421 = vector.broadcast %52 : vector<1x256xf32> to vector<2x256xf32>
    %422 = arith.mulf %420, %421 : vector<2x256xf32>
    %c18 = arith.constant 18 : index
    %423 = memref.load %arg1[%c18] : memref<144xf32, #tpu.memory_space<smem>>
    %424 = vector.broadcast %423 : f32 to vector<2x256xf32>
    %425 = arith.mulf %424, %401 : vector<2x256xf32>
    %426 = arith.addf %288, %425 : vector<2x256xf32>
    %c19 = arith.constant 19 : index
    %427 = memref.load %arg1[%c19] : memref<144xf32, #tpu.memory_space<smem>>
    %428 = vector.broadcast %427 : f32 to vector<2x256xf32>
    %429 = arith.mulf %428, %404 : vector<2x256xf32>
    %430 = arith.addf %426, %429 : vector<2x256xf32>
    %c20 = arith.constant 20 : index
    %431 = memref.load %arg1[%c20] : memref<144xf32, #tpu.memory_space<smem>>
    %432 = vector.broadcast %431 : f32 to vector<2x256xf32>
    %433 = arith.mulf %432, %407 : vector<2x256xf32>
    %434 = arith.addf %430, %433 : vector<2x256xf32>
    %c21 = arith.constant 21 : index
    %435 = memref.load %arg1[%c21] : memref<144xf32, #tpu.memory_space<smem>>
    %436 = vector.broadcast %435 : f32 to vector<2x256xf32>
    %437 = arith.mulf %436, %410 : vector<2x256xf32>
    %438 = arith.addf %434, %437 : vector<2x256xf32>
    %c22 = arith.constant 22 : index
    %439 = memref.load %arg1[%c22] : memref<144xf32, #tpu.memory_space<smem>>
    %440 = vector.broadcast %439 : f32 to vector<2x256xf32>
    %441 = arith.mulf %440, %398 : vector<2x256xf32>
    %442 = arith.addf %438, %441 : vector<2x256xf32>
    %c23 = arith.constant 23 : index
    %443 = memref.load %arg1[%c23] : memref<144xf32, #tpu.memory_space<smem>>
    %444 = vector.broadcast %443 : f32 to vector<2x256xf32>
    %445 = arith.mulf %444, %413 : vector<2x256xf32>
    %446 = arith.addf %442, %445 : vector<2x256xf32>
    %c24 = arith.constant 24 : index
    %447 = memref.load %arg1[%c24] : memref<144xf32, #tpu.memory_space<smem>>
    %448 = vector.broadcast %447 : f32 to vector<2x256xf32>
    %449 = arith.mulf %448, %416 : vector<2x256xf32>
    %450 = arith.addf %446, %449 : vector<2x256xf32>
    %c25 = arith.constant 25 : index
    %451 = memref.load %arg1[%c25] : memref<144xf32, #tpu.memory_space<smem>>
    %452 = vector.broadcast %451 : f32 to vector<2x256xf32>
    %453 = arith.mulf %452, %419 : vector<2x256xf32>
    %454 = arith.addf %450, %453 : vector<2x256xf32>
    %c26 = arith.constant 26 : index
    %455 = memref.load %arg1[%c26] : memref<144xf32, #tpu.memory_space<smem>>
    %456 = vector.broadcast %455 : f32 to vector<2x256xf32>
    %457 = arith.mulf %456, %422 : vector<2x256xf32>
    %458 = arith.addf %454, %457 : vector<2x256xf32>
    %c54 = arith.constant 54 : index
    %459 = memref.load %arg1[%c54] : memref<144xf32, #tpu.memory_space<smem>>
    %460 = vector.broadcast %459 : f32 to vector<2x256xf32>
    %461 = arith.mulf %460, %401 : vector<2x256xf32>
    %462 = arith.addf %324, %461 : vector<2x256xf32>
    %c55 = arith.constant 55 : index
    %463 = memref.load %arg1[%c55] : memref<144xf32, #tpu.memory_space<smem>>
    %464 = vector.broadcast %463 : f32 to vector<2x256xf32>
    %465 = arith.mulf %464, %404 : vector<2x256xf32>
    %466 = arith.addf %462, %465 : vector<2x256xf32>
    %c56 = arith.constant 56 : index
    %467 = memref.load %arg1[%c56] : memref<144xf32, #tpu.memory_space<smem>>
    %468 = vector.broadcast %467 : f32 to vector<2x256xf32>
    %469 = arith.mulf %468, %407 : vector<2x256xf32>
    %470 = arith.addf %466, %469 : vector<2x256xf32>
    %c57 = arith.constant 57 : index
    %471 = memref.load %arg1[%c57] : memref<144xf32, #tpu.memory_space<smem>>
    %472 = vector.broadcast %471 : f32 to vector<2x256xf32>
    %473 = arith.mulf %472, %410 : vector<2x256xf32>
    %474 = arith.addf %470, %473 : vector<2x256xf32>
    %c58 = arith.constant 58 : index
    %475 = memref.load %arg1[%c58] : memref<144xf32, #tpu.memory_space<smem>>
    %476 = vector.broadcast %475 : f32 to vector<2x256xf32>
    %477 = arith.mulf %476, %398 : vector<2x256xf32>
    %478 = arith.addf %474, %477 : vector<2x256xf32>
    %c59 = arith.constant 59 : index
    %479 = memref.load %arg1[%c59] : memref<144xf32, #tpu.memory_space<smem>>
    %480 = vector.broadcast %479 : f32 to vector<2x256xf32>
    %481 = arith.mulf %480, %413 : vector<2x256xf32>
    %482 = arith.addf %478, %481 : vector<2x256xf32>
    %c60 = arith.constant 60 : index
    %483 = memref.load %arg1[%c60] : memref<144xf32, #tpu.memory_space<smem>>
    %484 = vector.broadcast %483 : f32 to vector<2x256xf32>
    %485 = arith.mulf %484, %416 : vector<2x256xf32>
    %486 = arith.addf %482, %485 : vector<2x256xf32>
    %c61 = arith.constant 61 : index
    %487 = memref.load %arg1[%c61] : memref<144xf32, #tpu.memory_space<smem>>
    %488 = vector.broadcast %487 : f32 to vector<2x256xf32>
    %489 = arith.mulf %488, %419 : vector<2x256xf32>
    %490 = arith.addf %486, %489 : vector<2x256xf32>
    %c62 = arith.constant 62 : index
    %491 = memref.load %arg1[%c62] : memref<144xf32, #tpu.memory_space<smem>>
    %492 = vector.broadcast %491 : f32 to vector<2x256xf32>
    %493 = arith.mulf %492, %422 : vector<2x256xf32>
    %494 = arith.addf %490, %493 : vector<2x256xf32>
    %c90 = arith.constant 90 : index
    %495 = memref.load %arg1[%c90] : memref<144xf32, #tpu.memory_space<smem>>
    %496 = vector.broadcast %495 : f32 to vector<2x256xf32>
    %497 = arith.mulf %496, %401 : vector<2x256xf32>
    %498 = arith.addf %360, %497 : vector<2x256xf32>
    %c91 = arith.constant 91 : index
    %499 = memref.load %arg1[%c91] : memref<144xf32, #tpu.memory_space<smem>>
    %500 = vector.broadcast %499 : f32 to vector<2x256xf32>
    %501 = arith.mulf %500, %404 : vector<2x256xf32>
    %502 = arith.addf %498, %501 : vector<2x256xf32>
    %c92 = arith.constant 92 : index
    %503 = memref.load %arg1[%c92] : memref<144xf32, #tpu.memory_space<smem>>
    %504 = vector.broadcast %503 : f32 to vector<2x256xf32>
    %505 = arith.mulf %504, %407 : vector<2x256xf32>
    %506 = arith.addf %502, %505 : vector<2x256xf32>
    %c93 = arith.constant 93 : index
    %507 = memref.load %arg1[%c93] : memref<144xf32, #tpu.memory_space<smem>>
    %508 = vector.broadcast %507 : f32 to vector<2x256xf32>
    %509 = arith.mulf %508, %410 : vector<2x256xf32>
    %510 = arith.addf %506, %509 : vector<2x256xf32>
    %c94 = arith.constant 94 : index
    %511 = memref.load %arg1[%c94] : memref<144xf32, #tpu.memory_space<smem>>
    %512 = vector.broadcast %511 : f32 to vector<2x256xf32>
    %513 = arith.mulf %512, %398 : vector<2x256xf32>
    %514 = arith.addf %510, %513 : vector<2x256xf32>
    %c95 = arith.constant 95 : index
    %515 = memref.load %arg1[%c95] : memref<144xf32, #tpu.memory_space<smem>>
    %516 = vector.broadcast %515 : f32 to vector<2x256xf32>
    %517 = arith.mulf %516, %413 : vector<2x256xf32>
    %518 = arith.addf %514, %517 : vector<2x256xf32>
    %c96 = arith.constant 96 : index
    %519 = memref.load %arg1[%c96] : memref<144xf32, #tpu.memory_space<smem>>
    %520 = vector.broadcast %519 : f32 to vector<2x256xf32>
    %521 = arith.mulf %520, %416 : vector<2x256xf32>
    %522 = arith.addf %518, %521 : vector<2x256xf32>
    %c97 = arith.constant 97 : index
    %523 = memref.load %arg1[%c97] : memref<144xf32, #tpu.memory_space<smem>>
    %524 = vector.broadcast %523 : f32 to vector<2x256xf32>
    %525 = arith.mulf %524, %419 : vector<2x256xf32>
    %526 = arith.addf %522, %525 : vector<2x256xf32>
    %c98 = arith.constant 98 : index
    %527 = memref.load %arg1[%c98] : memref<144xf32, #tpu.memory_space<smem>>
    %528 = vector.broadcast %527 : f32 to vector<2x256xf32>
    %529 = arith.mulf %528, %422 : vector<2x256xf32>
    %530 = arith.addf %526, %529 : vector<2x256xf32>
    %c126 = arith.constant 126 : index
    %531 = memref.load %arg1[%c126] : memref<144xf32, #tpu.memory_space<smem>>
    %532 = vector.broadcast %531 : f32 to vector<2x256xf32>
    %533 = arith.mulf %532, %401 : vector<2x256xf32>
    %534 = arith.addf %396, %533 : vector<2x256xf32>
    %c127 = arith.constant 127 : index
    %535 = memref.load %arg1[%c127] : memref<144xf32, #tpu.memory_space<smem>>
    %536 = vector.broadcast %535 : f32 to vector<2x256xf32>
    %537 = arith.mulf %536, %404 : vector<2x256xf32>
    %538 = arith.addf %534, %537 : vector<2x256xf32>
    %c128 = arith.constant 128 : index
    %539 = memref.load %arg1[%c128] : memref<144xf32, #tpu.memory_space<smem>>
    %540 = vector.broadcast %539 : f32 to vector<2x256xf32>
    %541 = arith.mulf %540, %407 : vector<2x256xf32>
    %542 = arith.addf %538, %541 : vector<2x256xf32>
    %c129 = arith.constant 129 : index
    %543 = memref.load %arg1[%c129] : memref<144xf32, #tpu.memory_space<smem>>
    %544 = vector.broadcast %543 : f32 to vector<2x256xf32>
    %545 = arith.mulf %544, %410 : vector<2x256xf32>
    %546 = arith.addf %542, %545 : vector<2x256xf32>
    %c130 = arith.constant 130 : index
    %547 = memref.load %arg1[%c130] : memref<144xf32, #tpu.memory_space<smem>>
    %548 = vector.broadcast %547 : f32 to vector<2x256xf32>
    %549 = arith.mulf %548, %398 : vector<2x256xf32>
    %550 = arith.addf %546, %549 : vector<2x256xf32>
    %c131 = arith.constant 131 : index
    %551 = memref.load %arg1[%c131] : memref<144xf32, #tpu.memory_space<smem>>
    %552 = vector.broadcast %551 : f32 to vector<2x256xf32>
    %553 = arith.mulf %552, %413 : vector<2x256xf32>
    %554 = arith.addf %550, %553 : vector<2x256xf32>
    %c132 = arith.constant 132 : index
    %555 = memref.load %arg1[%c132] : memref<144xf32, #tpu.memory_space<smem>>
    %556 = vector.broadcast %555 : f32 to vector<2x256xf32>
    %557 = arith.mulf %556, %416 : vector<2x256xf32>
    %558 = arith.addf %554, %557 : vector<2x256xf32>
    %c133 = arith.constant 133 : index
    %559 = memref.load %arg1[%c133] : memref<144xf32, #tpu.memory_space<smem>>
    %560 = vector.broadcast %559 : f32 to vector<2x256xf32>
    %561 = arith.mulf %560, %419 : vector<2x256xf32>
    %562 = arith.addf %558, %561 : vector<2x256xf32>
    %c134 = arith.constant 134 : index
    %563 = memref.load %arg1[%c134] : memref<144xf32, #tpu.memory_space<smem>>
    %564 = vector.broadcast %563 : f32 to vector<2x256xf32>
    %565 = arith.mulf %564, %422 : vector<2x256xf32>
    %566 = arith.addf %562, %565 : vector<2x256xf32>
    %c0_52 = arith.constant 0 : index
    %c3_53 = arith.constant 3 : index
    %c0_54 = arith.constant 0 : index
    %567 = vector.load %arg2[%c0_52, %c3_53, %c0_54] : memref<2x4x256xf32, #tpu.memory_space<vmem>>, vector<2x1x256xf32>
    %568 = vector.shape_cast %567 : vector<2x1x256xf32> to vector<2x256xf32>
    %c17_i32_55 = arith.constant 17 : i32
    %569 = tpu.dynamic_rotate %568 by %c17_i32_55 dim 1 : vector<2x256xf32>, i32 -> vector<2x256xf32>
    %570 = vector.broadcast %28 : vector<1x256xf32> to vector<2x256xf32>
    %571 = arith.mulf %569, %570 : vector<2x256xf32>
    %c16_i32_56 = arith.constant 16 : i32
    %572 = tpu.dynamic_rotate %568 by %c16_i32_56 dim 1 : vector<2x256xf32>, i32 -> vector<2x256xf32>
    %573 = vector.broadcast %31 : vector<1x256xf32> to vector<2x256xf32>
    %574 = arith.mulf %572, %573 : vector<2x256xf32>
    %c15_i32_57 = arith.constant 15 : i32
    %575 = tpu.dynamic_rotate %568 by %c15_i32_57 dim 1 : vector<2x256xf32>, i32 -> vector<2x256xf32>
    %576 = vector.broadcast %35 : vector<1x256xf32> to vector<2x256xf32>
    %577 = arith.mulf %575, %576 : vector<2x256xf32>
    %c1_i32_58 = arith.constant 1 : i32
    %578 = tpu.dynamic_rotate %568 by %c1_i32_58 dim 1 : vector<2x256xf32>, i32 -> vector<2x256xf32>
    %579 = vector.broadcast %38 : vector<1x256xf32> to vector<2x256xf32>
    %580 = arith.mulf %578, %579 : vector<2x256xf32>
    %c255_i32_59 = arith.constant 255 : i32
    %581 = tpu.dynamic_rotate %568 by %c255_i32_59 dim 1 : vector<2x256xf32>, i32 -> vector<2x256xf32>
    %582 = vector.broadcast %41 : vector<1x256xf32> to vector<2x256xf32>
    %583 = arith.mulf %581, %582 : vector<2x256xf32>
    %c241_i32_60 = arith.constant 241 : i32
    %584 = tpu.dynamic_rotate %568 by %c241_i32_60 dim 1 : vector<2x256xf32>, i32 -> vector<2x256xf32>
    %585 = vector.broadcast %45 : vector<1x256xf32> to vector<2x256xf32>
    %586 = arith.mulf %584, %585 : vector<2x256xf32>
    %c240_i32_61 = arith.constant 240 : i32
    %587 = tpu.dynamic_rotate %568 by %c240_i32_61 dim 1 : vector<2x256xf32>, i32 -> vector<2x256xf32>
    %588 = vector.broadcast %48 : vector<1x256xf32> to vector<2x256xf32>
    %589 = arith.mulf %587, %588 : vector<2x256xf32>
    %c239_i32_62 = arith.constant 239 : i32
    %590 = tpu.dynamic_rotate %568 by %c239_i32_62 dim 1 : vector<2x256xf32>, i32 -> vector<2x256xf32>
    %591 = vector.broadcast %52 : vector<1x256xf32> to vector<2x256xf32>
    %592 = arith.mulf %590, %591 : vector<2x256xf32>
    %c27 = arith.constant 27 : index
    %593 = memref.load %arg1[%c27] : memref<144xf32, #tpu.memory_space<smem>>
    %594 = vector.broadcast %593 : f32 to vector<2x256xf32>
    %595 = arith.mulf %594, %571 : vector<2x256xf32>
    %596 = arith.addf %458, %595 : vector<2x256xf32>
    %c28 = arith.constant 28 : index
    %597 = memref.load %arg1[%c28] : memref<144xf32, #tpu.memory_space<smem>>
    %598 = vector.broadcast %597 : f32 to vector<2x256xf32>
    %599 = arith.mulf %598, %574 : vector<2x256xf32>
    %600 = arith.addf %596, %599 : vector<2x256xf32>
    %c29 = arith.constant 29 : index
    %601 = memref.load %arg1[%c29] : memref<144xf32, #tpu.memory_space<smem>>
    %602 = vector.broadcast %601 : f32 to vector<2x256xf32>
    %603 = arith.mulf %602, %577 : vector<2x256xf32>
    %604 = arith.addf %600, %603 : vector<2x256xf32>
    %c30 = arith.constant 30 : index
    %605 = memref.load %arg1[%c30] : memref<144xf32, #tpu.memory_space<smem>>
    %606 = vector.broadcast %605 : f32 to vector<2x256xf32>
    %607 = arith.mulf %606, %580 : vector<2x256xf32>
    %608 = arith.addf %604, %607 : vector<2x256xf32>
    %c31 = arith.constant 31 : index
    %609 = memref.load %arg1[%c31] : memref<144xf32, #tpu.memory_space<smem>>
    %610 = vector.broadcast %609 : f32 to vector<2x256xf32>
    %611 = arith.mulf %610, %568 : vector<2x256xf32>
    %612 = arith.addf %608, %611 : vector<2x256xf32>
    %c32 = arith.constant 32 : index
    %613 = memref.load %arg1[%c32] : memref<144xf32, #tpu.memory_space<smem>>
    %614 = vector.broadcast %613 : f32 to vector<2x256xf32>
    %615 = arith.mulf %614, %583 : vector<2x256xf32>
    %616 = arith.addf %612, %615 : vector<2x256xf32>
    %c33 = arith.constant 33 : index
    %617 = memref.load %arg1[%c33] : memref<144xf32, #tpu.memory_space<smem>>
    %618 = vector.broadcast %617 : f32 to vector<2x256xf32>
    %619 = arith.mulf %618, %586 : vector<2x256xf32>
    %620 = arith.addf %616, %619 : vector<2x256xf32>
    %c34 = arith.constant 34 : index
    %621 = memref.load %arg1[%c34] : memref<144xf32, #tpu.memory_space<smem>>
    %622 = vector.broadcast %621 : f32 to vector<2x256xf32>
    %623 = arith.mulf %622, %589 : vector<2x256xf32>
    %624 = arith.addf %620, %623 : vector<2x256xf32>
    %c35 = arith.constant 35 : index
    %625 = memref.load %arg1[%c35] : memref<144xf32, #tpu.memory_space<smem>>
    %626 = vector.broadcast %625 : f32 to vector<2x256xf32>
    %627 = arith.mulf %626, %592 : vector<2x256xf32>
    %628 = arith.addf %624, %627 : vector<2x256xf32>
    %c63 = arith.constant 63 : index
    %629 = memref.load %arg1[%c63] : memref<144xf32, #tpu.memory_space<smem>>
    %630 = vector.broadcast %629 : f32 to vector<2x256xf32>
    %631 = arith.mulf %630, %571 : vector<2x256xf32>
    %632 = arith.addf %494, %631 : vector<2x256xf32>
    %c64 = arith.constant 64 : index
    %633 = memref.load %arg1[%c64] : memref<144xf32, #tpu.memory_space<smem>>
    %634 = vector.broadcast %633 : f32 to vector<2x256xf32>
    %635 = arith.mulf %634, %574 : vector<2x256xf32>
    %636 = arith.addf %632, %635 : vector<2x256xf32>
    %c65 = arith.constant 65 : index
    %637 = memref.load %arg1[%c65] : memref<144xf32, #tpu.memory_space<smem>>
    %638 = vector.broadcast %637 : f32 to vector<2x256xf32>
    %639 = arith.mulf %638, %577 : vector<2x256xf32>
    %640 = arith.addf %636, %639 : vector<2x256xf32>
    %c66 = arith.constant 66 : index
    %641 = memref.load %arg1[%c66] : memref<144xf32, #tpu.memory_space<smem>>
    %642 = vector.broadcast %641 : f32 to vector<2x256xf32>
    %643 = arith.mulf %642, %580 : vector<2x256xf32>
    %644 = arith.addf %640, %643 : vector<2x256xf32>
    %c67 = arith.constant 67 : index
    %645 = memref.load %arg1[%c67] : memref<144xf32, #tpu.memory_space<smem>>
    %646 = vector.broadcast %645 : f32 to vector<2x256xf32>
    %647 = arith.mulf %646, %568 : vector<2x256xf32>
    %648 = arith.addf %644, %647 : vector<2x256xf32>
    %c68 = arith.constant 68 : index
    %649 = memref.load %arg1[%c68] : memref<144xf32, #tpu.memory_space<smem>>
    %650 = vector.broadcast %649 : f32 to vector<2x256xf32>
    %651 = arith.mulf %650, %583 : vector<2x256xf32>
    %652 = arith.addf %648, %651 : vector<2x256xf32>
    %c69 = arith.constant 69 : index
    %653 = memref.load %arg1[%c69] : memref<144xf32, #tpu.memory_space<smem>>
    %654 = vector.broadcast %653 : f32 to vector<2x256xf32>
    %655 = arith.mulf %654, %586 : vector<2x256xf32>
    %656 = arith.addf %652, %655 : vector<2x256xf32>
    %c70 = arith.constant 70 : index
    %657 = memref.load %arg1[%c70] : memref<144xf32, #tpu.memory_space<smem>>
    %658 = vector.broadcast %657 : f32 to vector<2x256xf32>
    %659 = arith.mulf %658, %589 : vector<2x256xf32>
    %660 = arith.addf %656, %659 : vector<2x256xf32>
    %c71 = arith.constant 71 : index
    %661 = memref.load %arg1[%c71] : memref<144xf32, #tpu.memory_space<smem>>
    %662 = vector.broadcast %661 : f32 to vector<2x256xf32>
    %663 = arith.mulf %662, %592 : vector<2x256xf32>
    %664 = arith.addf %660, %663 : vector<2x256xf32>
    %c99 = arith.constant 99 : index
    %665 = memref.load %arg1[%c99] : memref<144xf32, #tpu.memory_space<smem>>
    %666 = vector.broadcast %665 : f32 to vector<2x256xf32>
    %667 = arith.mulf %666, %571 : vector<2x256xf32>
    %668 = arith.addf %530, %667 : vector<2x256xf32>
    %c100 = arith.constant 100 : index
    %669 = memref.load %arg1[%c100] : memref<144xf32, #tpu.memory_space<smem>>
    %670 = vector.broadcast %669 : f32 to vector<2x256xf32>
    %671 = arith.mulf %670, %574 : vector<2x256xf32>
    %672 = arith.addf %668, %671 : vector<2x256xf32>
    %c101 = arith.constant 101 : index
    %673 = memref.load %arg1[%c101] : memref<144xf32, #tpu.memory_space<smem>>
    %674 = vector.broadcast %673 : f32 to vector<2x256xf32>
    %675 = arith.mulf %674, %577 : vector<2x256xf32>
    %676 = arith.addf %672, %675 : vector<2x256xf32>
    %c102 = arith.constant 102 : index
    %677 = memref.load %arg1[%c102] : memref<144xf32, #tpu.memory_space<smem>>
    %678 = vector.broadcast %677 : f32 to vector<2x256xf32>
    %679 = arith.mulf %678, %580 : vector<2x256xf32>
    %680 = arith.addf %676, %679 : vector<2x256xf32>
    %c103 = arith.constant 103 : index
    %681 = memref.load %arg1[%c103] : memref<144xf32, #tpu.memory_space<smem>>
    %682 = vector.broadcast %681 : f32 to vector<2x256xf32>
    %683 = arith.mulf %682, %568 : vector<2x256xf32>
    %684 = arith.addf %680, %683 : vector<2x256xf32>
    %c104 = arith.constant 104 : index
    %685 = memref.load %arg1[%c104] : memref<144xf32, #tpu.memory_space<smem>>
    %686 = vector.broadcast %685 : f32 to vector<2x256xf32>
    %687 = arith.mulf %686, %583 : vector<2x256xf32>
    %688 = arith.addf %684, %687 : vector<2x256xf32>
    %c105 = arith.constant 105 : index
    %689 = memref.load %arg1[%c105] : memref<144xf32, #tpu.memory_space<smem>>
    %690 = vector.broadcast %689 : f32 to vector<2x256xf32>
    %691 = arith.mulf %690, %586 : vector<2x256xf32>
    %692 = arith.addf %688, %691 : vector<2x256xf32>
    %c106 = arith.constant 106 : index
    %693 = memref.load %arg1[%c106] : memref<144xf32, #tpu.memory_space<smem>>
    %694 = vector.broadcast %693 : f32 to vector<2x256xf32>
    %695 = arith.mulf %694, %589 : vector<2x256xf32>
    %696 = arith.addf %692, %695 : vector<2x256xf32>
    %c107 = arith.constant 107 : index
    %697 = memref.load %arg1[%c107] : memref<144xf32, #tpu.memory_space<smem>>
    %698 = vector.broadcast %697 : f32 to vector<2x256xf32>
    %699 = arith.mulf %698, %592 : vector<2x256xf32>
    %700 = arith.addf %696, %699 : vector<2x256xf32>
    %c135 = arith.constant 135 : index
    %701 = memref.load %arg1[%c135] : memref<144xf32, #tpu.memory_space<smem>>
    %702 = vector.broadcast %701 : f32 to vector<2x256xf32>
    %703 = arith.mulf %702, %571 : vector<2x256xf32>
    %704 = arith.addf %566, %703 : vector<2x256xf32>
    %c136 = arith.constant 136 : index
    %705 = memref.load %arg1[%c136] : memref<144xf32, #tpu.memory_space<smem>>
    %706 = vector.broadcast %705 : f32 to vector<2x256xf32>
    %707 = arith.mulf %706, %574 : vector<2x256xf32>
    %708 = arith.addf %704, %707 : vector<2x256xf32>
    %c137 = arith.constant 137 : index
    %709 = memref.load %arg1[%c137] : memref<144xf32, #tpu.memory_space<smem>>
    %710 = vector.broadcast %709 : f32 to vector<2x256xf32>
    %711 = arith.mulf %710, %577 : vector<2x256xf32>
    %712 = arith.addf %708, %711 : vector<2x256xf32>
    %c138 = arith.constant 138 : index
    %713 = memref.load %arg1[%c138] : memref<144xf32, #tpu.memory_space<smem>>
    %714 = vector.broadcast %713 : f32 to vector<2x256xf32>
    %715 = arith.mulf %714, %580 : vector<2x256xf32>
    %716 = arith.addf %712, %715 : vector<2x256xf32>
    %c139 = arith.constant 139 : index
    %717 = memref.load %arg1[%c139] : memref<144xf32, #tpu.memory_space<smem>>
    %718 = vector.broadcast %717 : f32 to vector<2x256xf32>
    %719 = arith.mulf %718, %568 : vector<2x256xf32>
    %720 = arith.addf %716, %719 : vector<2x256xf32>
    %c140 = arith.constant 140 : index
    %721 = memref.load %arg1[%c140] : memref<144xf32, #tpu.memory_space<smem>>
    %722 = vector.broadcast %721 : f32 to vector<2x256xf32>
    %723 = arith.mulf %722, %583 : vector<2x256xf32>
    %724 = arith.addf %720, %723 : vector<2x256xf32>
    %c141 = arith.constant 141 : index
    %725 = memref.load %arg1[%c141] : memref<144xf32, #tpu.memory_space<smem>>
    %726 = vector.broadcast %725 : f32 to vector<2x256xf32>
    %727 = arith.mulf %726, %586 : vector<2x256xf32>
    %728 = arith.addf %724, %727 : vector<2x256xf32>
    %c142 = arith.constant 142 : index
    %729 = memref.load %arg1[%c142] : memref<144xf32, #tpu.memory_space<smem>>
    %730 = vector.broadcast %729 : f32 to vector<2x256xf32>
    %731 = arith.mulf %730, %589 : vector<2x256xf32>
    %732 = arith.addf %728, %731 : vector<2x256xf32>
    %c143 = arith.constant 143 : index
    %733 = memref.load %arg1[%c143] : memref<144xf32, #tpu.memory_space<smem>>
    %734 = vector.broadcast %733 : f32 to vector<2x256xf32>
    %735 = arith.mulf %734, %592 : vector<2x256xf32>
    %736 = arith.addf %732, %735 : vector<2x256xf32>
    %737 = math.absf %628 : vector<2x256xf32>
    %738 = math.absf %664 : vector<2x256xf32>
    %739 = arith.addf %737, %738 : vector<2x256xf32>
    %740 = math.absf %700 : vector<2x256xf32>
    %741 = arith.addf %739, %740 : vector<2x256xf32>
    %742 = math.absf %736 : vector<2x256xf32>
    %743 = arith.addf %741, %742 : vector<2x256xf32>
    %c0_i32_63 = arith.constant 0 : i32
    %744 = arith.cmpi eq, %arg0, %c0_i32_63 : i32
    %745 = arith.extui %744 : i1 to i32
    %c0_i32_64 = arith.constant 0 : i32
    %746 = arith.cmpi ne, %745, %c0_i32_64 : i32
    scf.if %746 {
      %cst_71 = arith.constant 0.000000e+00 : f32
      %753 = vector.broadcast %cst_71 : f32 to vector<2x256xf32>
      %c0_72 = arith.constant 0 : index
      %c0_73 = arith.constant 0 : index
      %754 = vector.load %arg4[%c0_72, %c0_73] : memref<2x256xf32, #tpu.memory_space<vmem>>, vector<2x256xf32>
      tpu.vector_store %arg4[%c0_72, %c0_73], %753 {strides = array<i32>} : memref<2x256xf32, #tpu.memory_space<vmem>>, vector<2x256xf32>,
      %cst_74 = arith.constant 0.000000e+00 : f32
      %c0_75 = arith.constant 0 : index
      %c0_76 = arith.constant 0 : index
      %755 = memref.load %arg3[%c0_75, %c0_76] : memref<1x1xf32, #tpu.memory_space<smem>>
      memref.store %cst_74, %arg3[%c0_75, %c0_76] : memref<1x1xf32, #tpu.memory_space<smem>>
    } else {
    }
    %c0_65 = arith.constant 0 : index
    %c0_66 = arith.constant 0 : index
    %747 = vector.load %arg4[%c0_65, %c0_66] : memref<2x256xf32, #tpu.memory_space<vmem>>, vector<2x256xf32>
    %748 = arith.addf %747, %743 : vector<2x256xf32>
    %c0_67 = arith.constant 0 : index
    %c0_68 = arith.constant 0 : index
    %749 = vector.load %arg4[%c0_67, %c0_68] : memref<2x256xf32, #tpu.memory_space<vmem>>, vector<2x256xf32>
    tpu.vector_store %arg4[%c0_67, %c0_68], %748 {strides = array<i32>} : memref<2x256xf32, #tpu.memory_space<vmem>>, vector<2x256xf32>,
    %c0_i32_69 = arith.constant 0 : i32
    %750 = arith.cmpi eq, %arg0, %c0_i32_69 : i32
    %751 = arith.extui %750 : i1 to i32
    %c0_i32_70 = arith.constant 0 : i32
    %752 = arith.cmpi ne, %751, %c0_i32_70 : i32
    scf.if %752 {
      %c0_71 = arith.constant 0 : index
      %c0_72 = arith.constant 0 : index
      %753 = vector.load %arg4[%c0_71, %c0_72] : memref<2x256xf32, #tpu.memory_space<vmem>>, vector<2x256xf32>
      %754 = vector.shape_cast %753 : vector<2x256xf32> to vector<1x2x256xf32>
      %cst_73 = arith.constant dense<0.000000e+00> : vector<1xf32>
      %755 = vector.multi_reduction <add>, %754, %cst_73 [1, 2] : vector<1x2x256xf32> to vector<1xf32>
      %756 = vector.shape_cast %755 : vector<1xf32> to vector<1x1x1xf32>
      %757 = vector.extract %756[0, 0, 0] : f32 from vector<1x1x1xf32>
      %cst_74 = arith.constant 4.8828125E-4 : f32
      %758 = arith.mulf %757, %cst_74 : f32
      %c0_75 = arith.constant 0 : index
      %c0_76 = arith.constant 0 : index
      %759 = memref.load %arg3[%c0_75, %c0_76] : memref<1x1xf32, #tpu.memory_space<smem>>
      memref.store %758, %arg3[%c0_75, %c0_76] : memref<1x1xf32, #tpu.memory_space<smem>>
    } else {
    }
    return
  }
  func.func @transform_0(%arg0: i32) -> i32 {
    %c0_i32 = arith.constant 0 : i32
    %c0_i32_0 = arith.constant 0 : i32
    return %c0_i32 : i32
  }
  func.func @transform_1(%arg0: i32) -> (i32, i32, i32) {
    %c0_i32 = arith.constant 0 : i32
    %c0_i32_0 = arith.constant 0 : i32
    %c0_i32_1 = arith.constant 0 : i32
    return %arg0, %c0_i32, %c0_i32_0 : i32, i32, i32
  }
  func.func @transform_2(%arg0: i32) -> (i32, i32) {
    %c0_i32 = arith.constant 0 : i32
    %c0_i32_0 = arith.constant 0 : i32
    %c0_i32_1 = arith.constant 0 : i32
    return %c0_i32, %c0_i32_0 : i32, i32
  }
}

</mosaic_0001>

<llo_original>
// kernel: geo_loss.1
$region0: #{geo_loss.1}
  #allocation0 [shape = 'u32[]', space=smem, size = 0x4, offset = 0x4, fixed_abs, tag = 'smem constant byte address 0x4 - core index']
  #allocation1 [shape = 'u32[144,128]{1,0:T(1,128)}', space=vmem, size = 0x12000, scoped, tag = 'internal scratch']
  #allocation2 [shape = 'f32[2,256]{1,0:T(2,128)}', space=vmem, size = 0x800, scoped, tag = 'scratch operand']
  %s0 = inlined_call_operand.vmem [shape: f32[144], index: 0, kind: input, shape index: {}]
  %s1 = inlined_call_operand.vmem [shape: f32[2,4,256], index: 1, kind: input, shape index: {}]
  %s2 = inlined_call_operand.hbm [shape: f32[1,1], index: 2, kind: output, shape index: {}]
  %s3 = sld [smem:[#allocation0]]
  $region30: #{geo_loss.1} parent=0
    _
  %s5 = ssub.s32 1, %s3
  %s6 = scalar_select 0, %s5, %s3
  $region1: #{geo_loss.1} parent=0
    #allocation3 [shape = 'u8[1024]{0}', space=smem, size = 0x400, scoped, tag = 'input window, operand 0, single buffered']
    #allocation4 [shape = 's32[1]{0}', space=sflag, size = 0x4, scoped, tag = 'scoped memory for geo_loss.1']
    #allocation5 [shape = 's32[1]{0}', space=sflag, size = 0x4, scoped, tag = 'scoped memory for geo_loss.1']
    #allocation6 [shape = 'u8[512]{0}', space=smem, size = 0x200, scoped, tag = 'output window, operand 0, single buffered']
    %7 = vsyncpa [#allocation5], 0
    %8 = vsyncpa [#allocation4], 0
    // Predicated region
    $region2: #{geo_loss.1} parent=1 // pred_check
      _
    $region3: #{geo_loss.1} parent=1 // pred_check_branch
      %10 = sbr.rel (0) target = $region5
    $region4: #{geo_loss.1} parent=1 // pred_region
      %s12 = ssub.s32 32, 32
      %13 = vsyncadd [#allocation5], %s12
      %s15 = sshll.u32 %s0, 4
      %s16 = int_to_ptr.vmem [resolvable:$true] %s15
      %18 = dma.vmem_to_smem %s16, 32, [#allocation3], [#allocation5]
    $region5: #{geo_loss.1} parent=1 // pred_fallthru
      _
    // Predicated region
    $region6: #{geo_loss.1} parent=1 // pred_check
      _
    $region7: #{geo_loss.1} parent=1 // pred_check_branch
      %20 = sbr.rel (0) target = $region9
    $region8: #{geo_loss.1} parent=1 // pred_region
      _
    $region9: #{geo_loss.1} parent=1 // pred_fallthru
      _
    // Predicated region
    $region10: #{geo_loss.1} parent=1 // pred_check
      _
    $region11: #{geo_loss.1} parent=1 // pred_check_branch
      %22 = sbr.rel (0) target = $region13
    $region12: #{geo_loss.1} parent=1 // pred_region
      %23 = dma.done [#allocation5], 32
    $region13: #{geo_loss.1} parent=1 // pred_fallthru
      _
    %24 = sfence
    %v25 = vlaneseq
    %v26 = vand.u32 %v25, 127
    %v27 = vadd.s32 %v26, 128
    %vm28 = vcmp.lt.s32.totalorder %v26, 0
    %v29 = vsub.s32 0, %v26
    %v30 = vsel %vm28, %v29, %v26
    %v31 = vshrl.u32 %v30, 4
    %v32 = vand.u32 %v30, 15
    %v33 = vsub.s32 0, %v32
    %v34 = vsel %vm28, %v33, %v32
    %vm35 = vcmp.lt.s32.totalorder %v27, 0
    %v36 = vsub.s32 0, %v27
    %v37 = vsel %vm35, %v36, %v27
    %v38 = vshrl.u32 %v37, 4
    %v39 = vand.u32 %v37, 15
    %v40 = vsub.s32 0, %v39
    %v41 = vsel %vm35, %v40, %v39
    %vm42 = vcmp.ne.s32.totalorder %v34, 0
    %vm43 = vcmp.ne.s32.totalorder %v41, 0
    %vm44 = vcmp.lt.s32.totalorder %v34, 0
    %vm45 = vcmp.lt.s32.totalorder %v41, 0
    %vm46 = vmand %vm44, %vm42
    %vm47 = vmand %vm45, %vm43
    %v48 = vadd.s32 %v34, 16
    %v49 = vadd.s32 %v41, 16
    %v50 = vsel %vm46, %v48, %v34
    %v51 = vsel %vm47, %v49, %v41
    %vm52 = vcmp.ge.s32.totalorder %v26, 16
    %vm53 = vcmp.ge.s32.totalorder %v27, 16
    %vm54 = vcmp.lt.s32.totalorder %v26, 240
    %vm55 = vcmp.lt.s32.totalorder %v27, 240
    %vm56 = vcmp.ge.s32.totalorder %v50, 1
    %vm57 = vcmp.ge.s32.totalorder %v51, 1
    %vm58 = vcmp.le.s32.totalorder %v50, 14
    %vm59 = vcmp.le.s32.totalorder %v51, 14
    %vm60 = vmand %vm52, %vm56
    %vm61 = vmand %vm53, %vm57
    %v62 = vsel %vm60, 1.0, 0.0
    %v63 = vsel %vm61, 1.0, 0.0
    %v64 = vsel %vm52, 1.0, 0.0
    %v65 = vsel %vm53, 1.0, 0.0
    %vm66 = vmand %vm52, %vm58
    %vm67 = vmand %vm53, %vm59
    %v68 = vsel %vm66, 1.0, 0.0
    %v69 = vsel %vm67, 1.0, 0.0
    %v70 = vsel %vm56, 1.0, 0.0
    %v71 = vsel %vm57, 1.0, 0.0
    %v72 = vsel %vm58, 1.0, 0.0
    %v73 = vsel %vm59, 1.0, 0.0
    %vm74 = vmand %vm54, %vm56
    %vm75 = vmand %vm55, %vm57
    %v76 = vsel %vm74, 1.0, 0.0
    %v77 = vsel %vm75, 1.0, 0.0
    %v78 = vsel %vm54, 1.0, 0.0
    %v79 = vsel %vm55, 1.0, 0.0
    %vm80 = vmand %vm54, %vm58
    %vm81 = vmand %vm55, %vm59
    %v82 = vsel %vm80, 1.0, 0.0
    %v83 = vsel %vm81, 1.0, 0.0
    %v84 = vld [vmem:[%s1] ss:$4 sm:$0x3]
    %s85 = scalar_lea.vmem %s1, 8
    %v86 = vld [vmem:[%s85] ss:$4 sm:$0x3]
    %v89 = vcombine.low %v84, %v86
    %v91 = vunpack.c.l.s4 1966171168
    %v92 = vunpack.c.0.s8 %v91
    %v93 = vlaneseq
    %v94 = vshrl.u32 %v93, 7
    %v95 = vsub.s32 %v92, %v94
    %v96 = vrot.slane %v89, %v95
    %v97 = vcombine.high %v96, %v96
    %v99 = vunpack.c.l.s4 1966171168
    %v100 = vunpack.c.0.s8 %v99
    %v101 = vlaneseq
    %v102 = vshrl.u32 %v101, 7
    %v103 = vsub.s32 %v100, %v102
    %v104 = vrot.slane %v96, %v103
    %v106 = vunpack.c.l.s4 1966171168
    %v107 = vunpack.c.0.s8 %v106
    %v108 = vlaneseq
    %v109 = vshrl.u32 %v108, 7
    %v110 = vsub.s32 %v107, %v109
    %v111 = vrot.slane %v97, %v110
    %114 = vrot.lane.b32.xlu0 %v104, 17
    %v115 = vpop.permute.xlu0 %114
    %116 = vrot.lane.b32.xlu0 %v111, 17
    %v117 = vpop.permute.xlu0 %116
    %vm118 = vcmp.lt.s32.totalorder %v26, 17
    %v119 = vsel %vm118, %v115, %v117
    %v120 = vsel %vm118, %v117, %v115
    %v121 = vmul.f32 %v120, %v62
    %v122 = vmul.f32 %v119, %v63
    %123 = vrot.lane.b32.xlu0 %v104, 16
    %v124 = vpop.permute.xlu0 %123
    %125 = vrot.lane.b32.xlu0 %v111, 16
    %v126 = vpop.permute.xlu0 %125
    %vm127 = vcmp.lt.s32.totalorder %v26, 16
    %v128 = vsel %vm127, %v124, %v126
    %v129 = vsel %vm127, %v126, %v124
    %v130 = vmul.f32 %v129, %v64
    %v131 = vmul.f32 %v128, %v65
    %132 = vrot.lane.b32.xlu0 %v104, 15
    %v133 = vpop.permute.xlu0 %132
    %134 = vrot.lane.b32.xlu0 %v111, 15
    %v135 = vpop.permute.xlu0 %134
    %vm136 = vcmp.lt.s32.totalorder %v26, 15
    %v137 = vsel %vm136, %v133, %v135
    %v138 = vsel %vm136, %v135, %v133
    %v139 = vmul.f32 %v138, %v68
    %v140 = vmul.f32 %v137, %v69
    %141 = vrot.lane.b32.xlu0 %v104, 1
    %v142 = vpop.permute.xlu0 %141
    %143 = vrot.lane.b32.xlu0 %v111, 1
    %v144 = vpop.permute.xlu0 %143
    %vm145 = vcmp.lt.s32.totalorder %v26, 1
    %v146 = vsel %vm145, %v142, %v144
    %v147 = vsel %vm145, %v144, %v142
    %v148 = vmul.f32 %v147, %v70
    %v149 = vmul.f32 %v146, %v71
    %150 = vrot.lane.b32.xlu0 %v104, 127
    %v151 = vpop.permute.xlu0 %150
    %152 = vrot.lane.b32.xlu0 %v111, 127
    %v153 = vpop.permute.xlu0 %152
    %vm154 = vcmp.lt.s32.totalorder %v26, 127
    %v155 = vsel %vm154, %v151, %v153
    %v156 = vsel %vm154, %v153, %v151
    %v157 = vmul.f32 %v155, %v72
    %v158 = vmul.f32 %v156, %v73
    %159 = vrot.lane.b32.xlu0 %v104, 113
    %v160 = vpop.permute.xlu0 %159
    %161 = vrot.lane.b32.xlu0 %v111, 113
    %v162 = vpop.permute.xlu0 %161
    %vm163 = vcmp.lt.s32.totalorder %v26, 113
    %v164 = vsel %vm163, %v160, %v162
    %v165 = vsel %vm163, %v162, %v160
    %v166 = vmul.f32 %v164, %v76
    %v167 = vmul.f32 %v165, %v77
    %168 = vrot.lane.b32.xlu0 %v104, 112
    %v169 = vpop.permute.xlu0 %168
    %170 = vrot.lane.b32.xlu0 %v111, 112
    %v171 = vpop.permute.xlu0 %170
    %vm172 = vcmp.lt.s32.totalorder %v26, 112
    %v173 = vsel %vm172, %v169, %v171
    %v174 = vsel %vm172, %v171, %v169
    %v175 = vmul.f32 %v173, %v78
    %v176 = vmul.f32 %v174, %v79
    %177 = vrot.lane.b32.xlu0 %v104, 111
    %v178 = vpop.permute.xlu0 %177
    %179 = vrot.lane.b32.xlu0 %v111, 111
    %v180 = vpop.permute.xlu0 %179
    %vm181 = vcmp.lt.s32.totalorder %v26, 111
    %v182 = vsel %vm181, %v178, %v180
    %v183 = vsel %vm181, %v180, %v178
    %v184 = vmul.f32 %v182, %v82
    %v185 = vmul.f32 %v183, %v83
    %s186 = sld [smem:[#allocation3]]
    %v187 = vstv %s186
    %v188 = vmul.f32 %v187, %v121
    %v189 = vmul.f32 %v187, %v122
    %v190 = vadd.f32 %v188, 0.0
    %v191 = vadd.f32 %v189, 0.0
    %s192 = sld [smem:[#allocation3 + $0x1]]
    %v193 = vstv %s192
    %v194 = vmul.f32 %v193, %v130
    %v195 = vmul.f32 %v193, %v131
    %v196 = vadd.f32 %v190, %v194
    %v197 = vadd.f32 %v191, %v195
    %s198 = sld [smem:[#allocation3 + $0x2]]
    %v199 = vstv %s198
    %v200 = vmul.f32 %v199, %v139
    %v201 = vmul.f32 %v199, %v140
    %v202 = vadd.f32 %v196, %v200
    %v203 = vadd.f32 %v197, %v201
    %s204 = sld [smem:[#allocation3 + $0x3]]
    %v205 = vstv %s204
    %v206 = vmul.f32 %v205, %v148
    %v207 = vmul.f32 %v205, %v149
    %v208 = vadd.f32 %v202, %v206
    %v209 = vadd.f32 %v203, %v207
    %s210 = sld [smem:[#allocation3 + $0x4]]
    %v211 = vstv %s210
    %v212 = vmul.f32 %v211, %v84
    %v213 = vmul.f32 %v211, %v86
    %v216 = vcombine.low %v212, %v213
    %v218 = vunpack.c.l.s4 1966171168
    %v219 = vunpack.c.0.s8 %v218
    %v220 = vlaneseq
    %v221 = vshrl.u32 %v220, 7
    %v222 = vsub.s32 %v219, %v221
    %v223 = vrot.slane %v216, %v222
    %v224 = vcombine.high %v223, %v223
    %v226 = vunpack.c.l.s4 1966171168
    %v227 = vunpack.c.0.s8 %v226
    %v228 = vlaneseq
    %v229 = vshrl.u32 %v228, 7
    %v230 = vsub.s32 %v227, %v229
    %v231 = vrot.slane %v223, %v230
    %v233 = vunpack.c.l.s4 1966171168
    %v234 = vunpack.c.0.s8 %v233
    %v235 = vlaneseq
    %v236 = vshrl.u32 %v235, 7
    %v237 = vsub.s32 %v234, %v236
    %v238 = vrot.slane %v224, %v237
    %v241 = vadd.f32 %v208, %v231
    %v242 = vadd.f32 %v209, %v238
    %s243 = sld [smem:[#allocation3 + $0x5]]
    %v244 = vstv %s243
    %v245 = vmul.f32 %v244, %v157
    %v246 = vmul.f32 %v244, %v158
    %v247 = vadd.f32 %v241, %v245
    %v248 = vadd.f32 %v242, %v246
    %s249 = sld [smem:[#allocation3 + $0x6]]
    %v250 = vstv %s249
    %v251 = vmul.f32 %v250, %v166
    %v252 = vmul.f32 %v250, %v167
    %v253 = vadd.f32 %v247, %v251
    %v254 = vadd.f32 %v248, %v252
    %s255 = sld [smem:[#allocation3 + $0x7]]
    %v256 = vstv %s255
    %v257 = vmul.f32 %v256, %v175
    %v258 = vmul.f32 %v256, %v176
    %v259 = vadd.f32 %v253, %v257
    %v260 = vadd.f32 %v254, %v258
    %s261 = sld [smem:[#allocation3 + $0x8]]
    %v262 = vstv %s261
    %v263 = vmul.f32 %v262, %v184
    %v264 = vmul.f32 %v262, %v185
    %v265 = vadd.f32 %v259, %v263
    %v266 = vadd.f32 %v260, %v264
    %s267 = sld [smem:[#allocation3 + $0x24]]
    %v268 = vstv %s267
    %v269 = vmul.f32 %v268, %v121
    %v270 = vmul.f32 %v268, %v122
    %v271 = vadd.f32 %v269, 0.0
    %v272 = vadd.f32 %v270, 0.0
    %s273 = sld [smem:[#allocation3 + $0x25]]
    %v274 = vstv %s273
    %v275 = vmul.f32 %v274, %v130
    %v276 = vmul.f32 %v274, %v131
    %v277 = vadd.f32 %v271, %v275
    %v278 = vadd.f32 %v272, %v276
    %s279 = sld [smem:[#allocation3 + $0x26]]
    %v280 = vstv %s279
    %v281 = vmul.f32 %v280, %v139
    %v282 = vmul.f32 %v280, %v140
    %v283 = vadd.f32 %v277, %v281
    %v284 = vadd.f32 %v278, %v282
    %s285 = sld [smem:[#allocation3 + $0x27]]
    %v286 = vstv %s285
    %v287 = vmul.f32 %v286, %v148
    %v288 = vmul.f32 %v286, %v149
    %v289 = vadd.f32 %v283, %v287
    %v290 = vadd.f32 %v284, %v288
    %s291 = sld [smem:[#allocation3 + $0x28]]
    %v292 = vstv %s291
    %v293 = vmul.f32 %v292, %v84
    %v294 = vmul.f32 %v292, %v86
    %v297 = vcombine.low %v293, %v294
    %v299 = vunpack.c.l.s4 1966171168
    %v300 = vunpack.c.0.s8 %v299
    %v301 = vlaneseq
    %v302 = vshrl.u32 %v301, 7
    %v303 = vsub.s32 %v300, %v302
    %v304 = vrot.slane %v297, %v303
    %v305 = vcombine.high %v304, %v304
    %v307 = vunpack.c.l.s4 1966171168
    %v308 = vunpack.c.0.s8 %v307
    %v309 = vlaneseq
    %v310 = vshrl.u32 %v309, 7
    %v311 = vsub.s32 %v308, %v310
    %v312 = vrot.slane %v304, %v311
    %v314 = vunpack.c.l.s4 1966171168
    %v315 = vunpack.c.0.s8 %v314
    %v316 = vlaneseq
    %v317 = vshrl.u32 %v316, 7
    %v318 = vsub.s32 %v315, %v317
    %v319 = vrot.slane %v305, %v318
    %v322 = vadd.f32 %v289, %v312
    %v323 = vadd.f32 %v290, %v319
    %s324 = sld [smem:[#allocation3 + $0x29]]
    %v325 = vstv %s324
    %v326 = vmul.f32 %v325, %v157
    %v327 = vmul.f32 %v325, %v158
    %v328 = vadd.f32 %v322, %v326
    %v329 = vadd.f32 %v323, %v327
    %s330 = sld [smem:[#allocation3 + $0x2a]]
    %v331 = vstv %s330
    %v332 = vmul.f32 %v331, %v166
    %v333 = vmul.f32 %v331, %v167
    %v334 = vadd.f32 %v328, %v332
    %v335 = vadd.f32 %v329, %v333
    %s336 = sld [smem:[#allocation3 + $0x2b]]
    %v337 = vstv %s336
    %v338 = vmul.f32 %v337, %v175
    %v339 = vmul.f32 %v337, %v176
    %v340 = vadd.f32 %v334, %v338
    %v341 = vadd.f32 %v335, %v339
    %s342 = sld [smem:[#allocation3 + $0x2c]]
    %v343 = vstv %s342
    %v344 = vmul.f32 %v343, %v184
    %v345 = vmul.f32 %v343, %v185
    %v346 = vadd.f32 %v340, %v344
    %v347 = vadd.f32 %v341, %v345
    %s348 = sld [smem:[#allocation3 + $0x48]]
    %v349 = vstv %s348
    %v350 = vmul.f32 %v349, %v121
    %v351 = vmul.f32 %v349, %v122
    %v352 = vadd.f32 %v350, 0.0
    %v353 = vadd.f32 %v351, 0.0
    %s354 = sld [smem:[#allocation3 + $0x49]]
    %v355 = vstv %s354
    %v356 = vmul.f32 %v355, %v130
    %v357 = vmul.f32 %v355, %v131
    %v358 = vadd.f32 %v352, %v356
    %v359 = vadd.f32 %v353, %v357
    %s360 = sld [smem:[#allocation3 + $0x4a]]
    %v361 = vstv %s360
    %v362 = vmul.f32 %v361, %v139
    %v363 = vmul.f32 %v361, %v140
    %v364 = vadd.f32 %v358, %v362
    %v365 = vadd.f32 %v359, %v363
    %s366 = sld [smem:[#allocation3 + $0x4b]]
    %v367 = vstv %s366
    %v368 = vmul.f32 %v367, %v148
    %v369 = vmul.f32 %v367, %v149
    %v370 = vadd.f32 %v364, %v368
    %v371 = vadd.f32 %v365, %v369
    %s372 = sld [smem:[#allocation3 + $0x4c]]
    %v373 = vstv %s372
    %v374 = vmul.f32 %v373, %v84
    %v375 = vmul.f32 %v373, %v86
    %v378 = vcombine.low %v374, %v375
    %v380 = vunpack.c.l.s4 1966171168
    %v381 = vunpack.c.0.s8 %v380
    %v382 = vlaneseq
    %v383 = vshrl.u32 %v382, 7
    %v384 = vsub.s32 %v381, %v383
    %v385 = vrot.slane %v378, %v384
    %v386 = vcombine.high %v385, %v385
    %v388 = vunpack.c.l.s4 1966171168
    %v389 = vunpack.c.0.s8 %v388
    %v390 = vlaneseq
    %v391 = vshrl.u32 %v390, 7
    %v392 = vsub.s32 %v389, %v391
    %v393 = vrot.slane %v385, %v392
    %v395 = vunpack.c.l.s4 1966171168
    %v396 = vunpack.c.0.s8 %v395
    %v397 = vlaneseq
    %v398 = vshrl.u32 %v397, 7
    %v399 = vsub.s32 %v396, %v398
    %v400 = vrot.slane %v386, %v399
    %v403 = vadd.f32 %v370, %v393
    %v404 = vadd.f32 %v371, %v400
    %s405 = sld [smem:[#allocation3 + $0x4d]]
    %v406 = vstv %s405
    %v407 = vmul.f32 %v406, %v157
    %v408 = vmul.f32 %v406, %v158
    %v409 = vadd.f32 %v403, %v407
    %v410 = vadd.f32 %v404, %v408
    %s411 = sld [smem:[#allocation3 + $0x4e]]
    %v412 = vstv %s411
    %v413 = vmul.f32 %v412, %v166
    %v414 = vmul.f32 %v412, %v167
    %v415 = vadd.f32 %v409, %v413
    %v416 = vadd.f32 %v410, %v414
    %s417 = sld [smem:[#allocation3 + $0x4f]]
    %v418 = vstv %s417
    %v419 = vmul.f32 %v418, %v175
    %v420 = vmul.f32 %v418, %v176
    %v421 = vadd.f32 %v415, %v419
    %v422 = vadd.f32 %v416, %v420
    %s423 = sld [smem:[#allocation3 + $0x50]]
    %v424 = vstv %s423
    %v425 = vmul.f32 %v424, %v184
    %v426 = vmul.f32 %v424, %v185
    %v427 = vadd.f32 %v421, %v425
    %v428 = vadd.f32 %v422, %v426
    %s429 = sld [smem:[#allocation3 + $0x6c]]
    %v430 = vstv %s429
    %v431 = vmul.f32 %v430, %v121
    %v432 = vmul.f32 %v430, %v122
    %v433 = vadd.f32 %v431, 0.0
    %v434 = vadd.f32 %v432, 0.0
    %s435 = sld [smem:[#allocation3 + $0x6d]]
    %v436 = vstv %s435
    %v437 = vmul.f32 %v436, %v130
    %v438 = vmul.f32 %v436, %v131
    %v439 = vadd.f32 %v433, %v437
    %v440 = vadd.f32 %v434, %v438
    %s441 = sld [smem:[#allocation3 + $0x6e]]
    %v442 = vstv %s441
    %v443 = vmul.f32 %v442, %v139
    %v444 = vmul.f32 %v442, %v140
    %v445 = vadd.f32 %v439, %v443
    %v446 = vadd.f32 %v440, %v444
    %s447 = sld [smem:[#allocation3 + $0x6f]]
    %v448 = vstv %s447
    %v449 = vmul.f32 %v448, %v148
    %v450 = vmul.f32 %v448, %v149
    %v451 = vadd.f32 %v445, %v449
    %v452 = vadd.f32 %v446, %v450
    %s453 = sld [smem:[#allocation3 + $0x70]]
    %v454 = vstv %s453
    %v455 = vmul.f32 %v454, %v84
    %v456 = vmul.f32 %v454, %v86
    %v459 = vcombine.low %v455, %v456
    %v461 = vunpack.c.l.s4 1966171168
    %v462 = vunpack.c.0.s8 %v461
    %v463 = vlaneseq
    %v464 = vshrl.u32 %v463, 7
    %v465 = vsub.s32 %v462, %v464
    %v466 = vrot.slane %v459, %v465
    %v467 = vcombine.high %v466, %v466
    %v469 = vunpack.c.l.s4 1966171168
    %v470 = vunpack.c.0.s8 %v469
    %v471 = vlaneseq
    %v472 = vshrl.u32 %v471, 7
    %v473 = vsub.s32 %v470, %v472
    %v474 = vrot.slane %v466, %v473
    %v476 = vunpack.c.l.s4 1966171168
    %v477 = vunpack.c.0.s8 %v476
    %v478 = vlaneseq
    %v479 = vshrl.u32 %v478, 7
    %v480 = vsub.s32 %v477, %v479
    %v481 = vrot.slane %v467, %v480
    %v484 = vadd.f32 %v451, %v474
    %v485 = vadd.f32 %v452, %v481
    %s486 = sld [smem:[#allocation3 + $0x71]]
    %v487 = vstv %s486
    %v488 = vmul.f32 %v487, %v157
    %v489 = vmul.f32 %v487, %v158
    %v490 = vadd.f32 %v484, %v488
    %v491 = vadd.f32 %v485, %v489
    %s492 = sld [smem:[#allocation3 + $0x72]]
    %v493 = vstv %s492
    %v494 = vmul.f32 %v493, %v166
    %v495 = vmul.f32 %v493, %v167
    %v496 = vadd.f32 %v490, %v494
    %v497 = vadd.f32 %v491, %v495
    %s498 = sld [smem:[#allocation3 + $0x73]]
    %v499 = vstv %s498
    %v500 = vmul.f32 %v499, %v175
    %v501 = vmul.f32 %v499, %v176
    %v502 = vadd.f32 %v496, %v500
    %v503 = vadd.f32 %v497, %v501
    %s504 = sld [smem:[#allocation3 + $0x74]]
    %v505 = vstv %s504
    %v506 = vmul.f32 %v505, %v184
    %v507 = vmul.f32 %v505, %v185
    %v508 = vadd.f32 %v502, %v506
    %v509 = vadd.f32 %v503, %v507
    %s510 = scalar_lea.vmem %s1, 1
    %v511 = vld [vmem:[%s510] ss:$4 sm:$0x3]
    %s512 = scalar_lea.vmem %s1, 9
    %v513 = vld [vmem:[%s512] ss:$4 sm:$0x3]
    %v516 = vcombine.low %v511, %v513
    %v518 = vunpack.c.l.s4 1966171168
    %v519 = vunpack.c.0.s8 %v518
    %v520 = vlaneseq
    %v521 = vshrl.u32 %v520, 7
    %v522 = vsub.s32 %v519, %v521
    %v523 = vrot.slane %v516, %v522
    %v524 = vcombine.high %v523, %v523
    %v526 = vunpack.c.l.s4 1966171168
    %v527 = vunpack.c.0.s8 %v526
    %v528 = vlaneseq
    %v529 = vshrl.u32 %v528, 7
    %v530 = vsub.s32 %v527, %v529
    %v531 = vrot.slane %v523, %v530
    %v533 = vunpack.c.l.s4 1966171168
    %v534 = vunpack.c.0.s8 %v533
    %v535 = vlaneseq
    %v536 = vshrl.u32 %v535, 7
    %v537 = vsub.s32 %v534, %v536
    %v538 = vrot.slane %v524, %v537
    %541 = vrot.lane.b32.xlu0 %v531, 17
    %v542 = vpop.permute.xlu0 %541
    %543 = vrot.lane.b32.xlu0 %v538, 17
    %v544 = vpop.permute.xlu0 %543
    %v545 = vsel %vm118, %v542, %v544
    %v546 = vsel %vm118, %v544, %v542
    %v547 = vmul.f32 %v546, %v62
    %v548 = vmul.f32 %v545, %v63
    %549 = vrot.lane.b32.xlu0 %v531, 16
    %v550 = vpop.permute.xlu0 %549
    %551 = vrot.lane.b32.xlu0 %v538, 16
    %v552 = vpop.permute.xlu0 %551
    %v553 = vsel %vm127, %v550, %v552
    %v554 = vsel %vm127, %v552, %v550
    %v555 = vmul.f32 %v554, %v64
    %v556 = vmul.f32 %v553, %v65
    %557 = vrot.lane.b32.xlu0 %v531, 15
    %v558 = vpop.permute.xlu0 %557
    %559 = vrot.lane.b32.xlu0 %v538, 15
    %v560 = vpop.permute.xlu0 %559
    %v561 = vsel %vm136, %v558, %v560
    %v562 = vsel %vm136, %v560, %v558
    %v563 = vmul.f32 %v562, %v68
    %v564 = vmul.f32 %v561, %v69
    %565 = vrot.lane.b32.xlu0 %v531, 1
    %v566 = vpop.permute.xlu0 %565
    %567 = vrot.lane.b32.xlu0 %v538, 1
    %v568 = vpop.permute.xlu0 %567
    %v569 = vsel %vm145, %v566, %v568
    %v570 = vsel %vm145, %v568, %v566
    %v571 = vmul.f32 %v570, %v70
    %v572 = vmul.f32 %v569, %v71
    %573 = vrot.lane.b32.xlu0 %v531, 127
    %v574 = vpop.permute.xlu0 %573
    %575 = vrot.lane.b32.xlu0 %v538, 127
    %v576 = vpop.permute.xlu0 %575
    %v577 = vsel %vm154, %v574, %v576
    %v578 = vsel %vm154, %v576, %v574
    %v579 = vmul.f32 %v577, %v72
    %v580 = vmul.f32 %v578, %v73
    %581 = vrot.lane.b32.xlu0 %v531, 113
    %v582 = vpop.permute.xlu0 %581
    %583 = vrot.lane.b32.xlu0 %v538, 113
    %v584 = vpop.permute.xlu0 %583
    %v585 = vsel %vm163, %v582, %v584
    %v586 = vsel %vm163, %v584, %v582
    %v587 = vmul.f32 %v585, %v76
    %v588 = vmul.f32 %v586, %v77
    %589 = vrot.lane.b32.xlu0 %v531, 112
    %v590 = vpop.permute.xlu0 %589
    %591 = vrot.lane.b32.xlu0 %v538, 112
    %v592 = vpop.permute.xlu0 %591
    %v593 = vsel %vm172, %v590, %v592
    %v594 = vsel %vm172, %v592, %v590
    %v595 = vmul.f32 %v593, %v78
    %v596 = vmul.f32 %v594, %v79
    %597 = vrot.lane.b32.xlu0 %v531, 111
    %v598 = vpop.permute.xlu0 %597
    %599 = vrot.lane.b32.xlu0 %v538, 111
    %v600 = vpop.permute.xlu0 %599
    %v601 = vsel %vm181, %v598, %v600
    %v602 = vsel %vm181, %v600, %v598
    %v603 = vmul.f32 %v601, %v82
    %v604 = vmul.f32 %v602, %v83
    %s605 = sld [smem:[#allocation3 + $0x9]]
    %v606 = vstv %s605
    %v607 = vmul.f32 %v606, %v547
    %v608 = vmul.f32 %v606, %v548
    %v609 = vadd.f32 %v265, %v607
    %v610 = vadd.f32 %v266, %v608
    %s611 = sld [smem:[#allocation3 + $0xa]]
    %v612 = vstv %s611
    %v613 = vmul.f32 %v612, %v555
    %v614 = vmul.f32 %v612, %v556
    %v615 = vadd.f32 %v609, %v613
    %v616 = vadd.f32 %v610, %v614
    %s617 = sld [smem:[#allocation3 + $0xb]]
    %v618 = vstv %s617
    %v619 = vmul.f32 %v618, %v563
    %v620 = vmul.f32 %v618, %v564
    %v621 = vadd.f32 %v615, %v619
    %v622 = vadd.f32 %v616, %v620
    %s623 = sld [smem:[#allocation3 + $0xc]]
    %v624 = vstv %s623
    %v625 = vmul.f32 %v624, %v571
    %v626 = vmul.f32 %v624, %v572
    %v627 = vadd.f32 %v621, %v625
    %v628 = vadd.f32 %v622, %v626
    %s629 = sld [smem:[#allocation3 + $0xd]]
    %v630 = vstv %s629
    %v631 = vmul.f32 %v630, %v511
    %v632 = vmul.f32 %v630, %v513
    %v635 = vcombine.low %v631, %v632
    %v637 = vunpack.c.l.s4 1966171168
    %v638 = vunpack.c.0.s8 %v637
    %v639 = vlaneseq
    %v640 = vshrl.u32 %v639, 7
    %v641 = vsub.s32 %v638, %v640
    %v642 = vrot.slane %v635, %v641
    %v643 = vcombine.high %v642, %v642
    %v645 = vunpack.c.l.s4 1966171168
    %v646 = vunpack.c.0.s8 %v645
    %v647 = vlaneseq
    %v648 = vshrl.u32 %v647, 7
    %v649 = vsub.s32 %v646, %v648
    %v650 = vrot.slane %v642, %v649
    %v652 = vunpack.c.l.s4 1966171168
    %v653 = vunpack.c.0.s8 %v652
    %v654 = vlaneseq
    %v655 = vshrl.u32 %v654, 7
    %v656 = vsub.s32 %v653, %v655
    %v657 = vrot.slane %v643, %v656
    %v660 = vadd.f32 %v627, %v650
    %v661 = vadd.f32 %v628, %v657
    %s662 = sld [smem:[#allocation3 + $0xe]]
    %v663 = vstv %s662
    %v664 = vmul.f32 %v663, %v579
    %v665 = vmul.f32 %v663, %v580
    %v666 = vadd.f32 %v660, %v664
    %v667 = vadd.f32 %v661, %v665
    %s668 = sld [smem:[#allocation3 + $0xf]]
    %v669 = vstv %s668
    %v670 = vmul.f32 %v669, %v587
    %v671 = vmul.f32 %v669, %v588
    %v672 = vadd.f32 %v666, %v670
    %v673 = vadd.f32 %v667, %v671
    %s674 = sld [smem:[#allocation3 + $0x10]]
    %v675 = vstv %s674
    %v676 = vmul.f32 %v675, %v595
    %v677 = vmul.f32 %v675, %v596
    %v678 = vadd.f32 %v672, %v676
    %v679 = vadd.f32 %v673, %v677
    %s680 = sld [smem:[#allocation3 + $0x11]]
    %v681 = vstv %s680
    %v682 = vmul.f32 %v681, %v603
    %v683 = vmul.f32 %v681, %v604
    %v684 = vadd.f32 %v678, %v682
    %v685 = vadd.f32 %v679, %v683
    %s686 = sld [smem:[#allocation3 + $0x2d]]
    %v687 = vstv %s686
    %v688 = vmul.f32 %v687, %v547
    %v689 = vmul.f32 %v687, %v548
    %v690 = vadd.f32 %v346, %v688
    %v691 = vadd.f32 %v347, %v689
    %s692 = sld [smem:[#allocation3 + $0x2e]]
    %v693 = vstv %s692
    %v694 = vmul.f32 %v693, %v555
    %v695 = vmul.f32 %v693, %v556
    %v696 = vadd.f32 %v690, %v694
    %v697 = vadd.f32 %v691, %v695
    %s698 = sld [smem:[#allocation3 + $0x2f]]
    %v699 = vstv %s698
    %v700 = vmul.f32 %v699, %v563
    %v701 = vmul.f32 %v699, %v564
    %v702 = vadd.f32 %v696, %v700
    %v703 = vadd.f32 %v697, %v701
    %s704 = sld [smem:[#allocation3 + $0x30]]
    %v705 = vstv %s704
    %v706 = vmul.f32 %v705, %v571
    %v707 = vmul.f32 %v705, %v572
    %v708 = vadd.f32 %v702, %v706
    %v709 = vadd.f32 %v703, %v707
    %s710 = sld [smem:[#allocation3 + $0x31]]
    %v711 = vstv %s710
    %v712 = vmul.f32 %v711, %v511
    %v713 = vmul.f32 %v711, %v513
    %v716 = vcombine.low %v712, %v713
    %v718 = vunpack.c.l.s4 1966171168
    %v719 = vunpack.c.0.s8 %v718
    %v720 = vlaneseq
    %v721 = vshrl.u32 %v720, 7
    %v722 = vsub.s32 %v719, %v721
    %v723 = vrot.slane %v716, %v722
    %v724 = vcombine.high %v723, %v723
    %v726 = vunpack.c.l.s4 1966171168
    %v727 = vunpack.c.0.s8 %v726
    %v728 = vlaneseq
    %v729 = vshrl.u32 %v728, 7
    %v730 = vsub.s32 %v727, %v729
    %v731 = vrot.slane %v723, %v730
    %v733 = vunpack.c.l.s4 1966171168
    %v734 = vunpack.c.0.s8 %v733
    %v735 = vlaneseq
    %v736 = vshrl.u32 %v735, 7
    %v737 = vsub.s32 %v734, %v736
    %v738 = vrot.slane %v724, %v737
    %v741 = vadd.f32 %v708, %v731
    %v742 = vadd.f32 %v709, %v738
    %s743 = sld [smem:[#allocation3 + $0x32]]
    %v744 = vstv %s743
    %v745 = vmul.f32 %v744, %v579
    %v746 = vmul.f32 %v744, %v580
    %v747 = vadd.f32 %v741, %v745
    %v748 = vadd.f32 %v742, %v746
    %s749 = sld [smem:[#allocation3 + $0x33]]
    %v750 = vstv %s749
    %v751 = vmul.f32 %v750, %v587
    %v752 = vmul.f32 %v750, %v588
    %v753 = vadd.f32 %v747, %v751
    %v754 = vadd.f32 %v748, %v752
    %s755 = sld [smem:[#allocation3 + $0x34]]
    %v756 = vstv %s755
    %v757 = vmul.f32 %v756, %v595
    %v758 = vmul.f32 %v756, %v596
    %v759 = vadd.f32 %v753, %v757
    %v760 = vadd.f32 %v754, %v758
    %s761 = sld [smem:[#allocation3 + $0x35]]
    %v762 = vstv %s761
    %v763 = vmul.f32 %v762, %v603
    %v764 = vmul.f32 %v762, %v604
    %v765 = vadd.f32 %v759, %v763
    %v766 = vadd.f32 %v760, %v764
    %s767 = sld [smem:[#allocation3 + $0x51]]
    %v768 = vstv %s767
    %v769 = vmul.f32 %v768, %v547
    %v770 = vmul.f32 %v768, %v548
    %v771 = vadd.f32 %v427, %v769
    %v772 = vadd.f32 %v428, %v770
    %s773 = sld [smem:[#allocation3 + $0x52]]
    %v774 = vstv %s773
    %v775 = vmul.f32 %v774, %v555
    %v776 = vmul.f32 %v774, %v556
    %v777 = vadd.f32 %v771, %v775
    %v778 = vadd.f32 %v772, %v776
    %s779 = sld [smem:[#allocation3 + $0x53]]
    %v780 = vstv %s779
    %v781 = vmul.f32 %v780, %v563
    %v782 = vmul.f32 %v780, %v564
    %v783 = vadd.f32 %v777, %v781
    %v784 = vadd.f32 %v778, %v782
    %s785 = sld [smem:[#allocation3 + $0x54]]
    %v786 = vstv %s785
    %v787 = vmul.f32 %v786, %v571
    %v788 = vmul.f32 %v786, %v572
    %v789 = vadd.f32 %v783, %v787
    %v790 = vadd.f32 %v784, %v788
    %s791 = sld [smem:[#allocation3 + $0x55]]
    %v792 = vstv %s791
    %v793 = vmul.f32 %v792, %v511
    %v794 = vmul.f32 %v792, %v513
    %v797 = vcombine.low %v793, %v794
    %v799 = vunpack.c.l.s4 1966171168
    %v800 = vunpack.c.0.s8 %v799
    %v801 = vlaneseq
    %v802 = vshrl.u32 %v801, 7
    %v803 = vsub.s32 %v800, %v802
    %v804 = vrot.slane %v797, %v803
    %v805 = vcombine.high %v804, %v804
    %v807 = vunpack.c.l.s4 1966171168
    %v808 = vunpack.c.0.s8 %v807
    %v809 = vlaneseq
    %v810 = vshrl.u32 %v809, 7
    %v811 = vsub.s32 %v808, %v810
    %v812 = vrot.slane %v804, %v811
    %v814 = vunpack.c.l.s4 1966171168
    %v815 = vunpack.c.0.s8 %v814
    %v816 = vlaneseq
    %v817 = vshrl.u32 %v816, 7
    %v818 = vsub.s32 %v815, %v817
    %v819 = vrot.slane %v805, %v818
    %v822 = vadd.f32 %v789, %v812
    %v823 = vadd.f32 %v790, %v819
    %s824 = sld [smem:[#allocation3 + $0x56]]
    %v825 = vstv %s824
    %v826 = vmul.f32 %v825, %v579
    %v827 = vmul.f32 %v825, %v580
    %v828 = vadd.f32 %v822, %v826
    %v829 = vadd.f32 %v823, %v827
    %s830 = sld [smem:[#allocation3 + $0x57]]
    %v831 = vstv %s830
    %v832 = vmul.f32 %v831, %v587
    %v833 = vmul.f32 %v831, %v588
    %v834 = vadd.f32 %v828, %v832
    %v835 = vadd.f32 %v829, %v833
    %s836 = sld [smem:[#allocation3 + $0x58]]
    %v837 = vstv %s836
    %v838 = vmul.f32 %v837, %v595
    %v839 = vmul.f32 %v837, %v596
    %v840 = vadd.f32 %v834, %v838
    %v841 = vadd.f32 %v835, %v839
    %s842 = sld [smem:[#allocation3 + $0x59]]
    %v843 = vstv %s842
    %v844 = vmul.f32 %v843, %v603
    %v845 = vmul.f32 %v843, %v604
    %v846 = vadd.f32 %v840, %v844
    %v847 = vadd.f32 %v841, %v845
    %s848 = sld [smem:[#allocation3 + $0x75]]
    %v849 = vstv %s848
    %v850 = vmul.f32 %v849, %v547
    %v851 = vmul.f32 %v849, %v548
    %v852 = vadd.f32 %v508, %v850
    %v853 = vadd.f32 %v509, %v851
    %s854 = sld [smem:[#allocation3 + $0x76]]
    %v855 = vstv %s854
    %v856 = vmul.f32 %v855, %v555
    %v857 = vmul.f32 %v855, %v556
    %v858 = vadd.f32 %v852, %v856
    %v859 = vadd.f32 %v853, %v857
    %s860 = sld [smem:[#allocation3 + $0x77]]
    %v861 = vstv %s860
    %v862 = vmul.f32 %v861, %v563
    %v863 = vmul.f32 %v861, %v564
    %v864 = vadd.f32 %v858, %v862
    %v865 = vadd.f32 %v859, %v863
    %s866 = sld [smem:[#allocation3 + $0x78]]
    %v867 = vstv %s866
    %v868 = vmul.f32 %v867, %v571
    %v869 = vmul.f32 %v867, %v572
    %v870 = vadd.f32 %v864, %v868
    %v871 = vadd.f32 %v865, %v869
    %s872 = sld [smem:[#allocation3 + $0x79]]
    %v873 = vstv %s872
    %v874 = vmul.f32 %v873, %v511
    %v875 = vmul.f32 %v873, %v513
    %v878 = vcombine.low %v874, %v875
    %v880 = vunpack.c.l.s4 1966171168
    %v881 = vunpack.c.0.s8 %v880
    %v882 = vlaneseq
    %v883 = vshrl.u32 %v882, 7
    %v884 = vsub.s32 %v881, %v883
    %v885 = vrot.slane %v878, %v884
    %v886 = vcombine.high %v885, %v885
    %v888 = vunpack.c.l.s4 1966171168
    %v889 = vunpack.c.0.s8 %v888
    %v890 = vlaneseq
    %v891 = vshrl.u32 %v890, 7
    %v892 = vsub.s32 %v889, %v891
    %v893 = vrot.slane %v885, %v892
    %v895 = vunpack.c.l.s4 1966171168
    %v896 = vunpack.c.0.s8 %v895
    %v897 = vlaneseq
    %v898 = vshrl.u32 %v897, 7
    %v899 = vsub.s32 %v896, %v898
    %v900 = vrot.slane %v886, %v899
    %v903 = vadd.f32 %v870, %v893
    %v904 = vadd.f32 %v871, %v900
    %s905 = sld [smem:[#allocation3 + $0x7a]]
    %v906 = vstv %s905
    %v907 = vmul.f32 %v906, %v579
    %v908 = vmul.f32 %v906, %v580
    %v909 = vadd.f32 %v903, %v907
    %v910 = vadd.f32 %v904, %v908
    %s911 = sld [smem:[#allocation3 + $0x7b]]
    %v912 = vstv %s911
    %v913 = vmul.f32 %v912, %v587
    %v914 = vmul.f32 %v912, %v588
    %v915 = vadd.f32 %v909, %v913
    %v916 = vadd.f32 %v910, %v914
    %s917 = sld [smem:[#allocation3 + $0x7c]]
    %v918 = vstv %s917
    %v919 = vmul.f32 %v918, %v595
    %v920 = vmul.f32 %v918, %v596
    %v921 = vadd.f32 %v915, %v919
    %v922 = vadd.f32 %v916, %v920
    %s923 = sld [smem:[#allocation3 + $0x7d]]
    %v924 = vstv %s923
    %v925 = vmul.f32 %v924, %v603
    %v926 = vmul.f32 %v924, %v604
    %v927 = vadd.f32 %v921, %v925
    %v928 = vadd.f32 %v922, %v926
    %s929 = scalar_lea.vmem %s1, 2
    %v930 = vld [vmem:[%s929] ss:$4 sm:$0x3]
    %s931 = scalar_lea.vmem %s1, 10
    %v932 = vld [vmem:[%s931] ss:$4 sm:$0x3]
    %v935 = vcombine.low %v930, %v932
    %v937 = vunpack.c.l.s4 1966171168
    %v938 = vunpack.c.0.s8 %v937
    %v939 = vlaneseq
    %v940 = vshrl.u32 %v939, 7
    %v941 = vsub.s32 %v938, %v940
    %v942 = vrot.slane %v935, %v941
    %v943 = vcombine.high %v942, %v942
    %v945 = vunpack.c.l.s4 1966171168
    %v946 = vunpack.c.0.s8 %v945
    %v947 = vlaneseq
    %v948 = vshrl.u32 %v947, 7
    %v949 = vsub.s32 %v946, %v948
    %v950 = vrot.slane %v942, %v949
    %v952 = vunpack.c.l.s4 1966171168
    %v953 = vunpack.c.0.s8 %v952
    %v954 = vlaneseq
    %v955 = vshrl.u32 %v954, 7
    %v956 = vsub.s32 %v953, %v955
    %v957 = vrot.slane %v943, %v956
    %960 = vrot.lane.b32.xlu0 %v950, 17
    %v961 = vpop.permute.xlu0 %960
    %962 = vrot.lane.b32.xlu0 %v957, 17
    %v963 = vpop.permute.xlu0 %962
    %v964 = vsel %vm118, %v961, %v963
    %v965 = vsel %vm118, %v963, %v961
    %v966 = vmul.f32 %v965, %v62
    %v967 = vmul.f32 %v964, %v63
    %968 = vrot.lane.b32.xlu0 %v950, 16
    %v969 = vpop.permute.xlu0 %968
    %970 = vrot.lane.b32.xlu0 %v957, 16
    %v971 = vpop.permute.xlu0 %970
    %v972 = vsel %vm127, %v969, %v971
    %v973 = vsel %vm127, %v971, %v969
    %v974 = vmul.f32 %v973, %v64
    %v975 = vmul.f32 %v972, %v65
    %976 = vrot.lane.b32.xlu0 %v950, 15
    %v977 = vpop.permute.xlu0 %976
    %978 = vrot.lane.b32.xlu0 %v957, 15
    %v979 = vpop.permute.xlu0 %978
    %v980 = vsel %vm136, %v977, %v979
    %v981 = vsel %vm136, %v979, %v977
    %v982 = vmul.f32 %v981, %v68
    %v983 = vmul.f32 %v980, %v69
    %984 = vrot.lane.b32.xlu0 %v950, 1
    %v985 = vpop.permute.xlu0 %984
    %986 = vrot.lane.b32.xlu0 %v957, 1
    %v987 = vpop.permute.xlu0 %986
    %v988 = vsel %vm145, %v985, %v987
    %v989 = vsel %vm145, %v987, %v985
    %v990 = vmul.f32 %v989, %v70
    %v991 = vmul.f32 %v988, %v71
    %992 = vrot.lane.b32.xlu0 %v950, 127
    %v993 = vpop.permute.xlu0 %992
    %994 = vrot.lane.b32.xlu0 %v957, 127
    %v995 = vpop.permute.xlu0 %994
    %v996 = vsel %vm154, %v993, %v995
    %v997 = vsel %vm154, %v995, %v993
    %v998 = vmul.f32 %v996, %v72
    %v999 = vmul.f32 %v997, %v73
    %1000 = vrot.lane.b32.xlu0 %v950, 113
    %v1001 = vpop.permute.xlu0 %1000
    %1002 = vrot.lane.b32.xlu0 %v957, 113
    %v1003 = vpop.permute.xlu0 %1002
    %v1004 = vsel %vm163, %v1001, %v1003
    %v1005 = vsel %vm163, %v1003, %v1001
    %v1006 = vmul.f32 %v1004, %v76
    %v1007 = vmul.f32 %v1005, %v77
    %1008 = vrot.lane.b32.xlu0 %v950, 112
    %v1009 = vpop.permute.xlu0 %1008
    %1010 = vrot.lane.b32.xlu0 %v957, 112
    %v1011 = vpop.permute.xlu0 %1010
    %v1012 = vsel %vm172, %v1009, %v1011
    %v1013 = vsel %vm172, %v1011, %v1009
    %v1014 = vmul.f32 %v1012, %v78
    %v1015 = vmul.f32 %v1013, %v79
    %1016 = vrot.lane.b32.xlu0 %v950, 111
    %v1017 = vpop.permute.xlu0 %1016
    %1018 = vrot.lane.b32.xlu0 %v957, 111
    %v1019 = vpop.permute.xlu0 %1018
    %v1020 = vsel %vm181, %v1017, %v1019
    %v1021 = vsel %vm181, %v1019, %v1017
    %v1022 = vmul.f32 %v1020, %v82
    %v1023 = vmul.f32 %v1021, %v83
    %s1024 = sld [smem:[#allocation3 + $0x12]]
    %v1025 = vstv %s1024
    %v1026 = vmul.f32 %v1025, %v966
    %v1027 = vmul.f32 %v1025, %v967
    %v1028 = vadd.f32 %v684, %v1026
    %v1029 = vadd.f32 %v685, %v1027
    %s1030 = sld [smem:[#allocation3 + $0x13]]
    %v1031 = vstv %s1030
    %v1032 = vmul.f32 %v1031, %v974
    %v1033 = vmul.f32 %v1031, %v975
    %v1034 = vadd.f32 %v1028, %v1032
    %v1035 = vadd.f32 %v1029, %v1033
    %s1036 = sld [smem:[#allocation3 + $0x14]]
    %v1037 = vstv %s1036
    %v1038 = vmul.f32 %v1037, %v982
    %v1039 = vmul.f32 %v1037, %v983
    %v1040 = vadd.f32 %v1034, %v1038
    %v1041 = vadd.f32 %v1035, %v1039
    %s1042 = sld [smem:[#allocation3 + $0x15]]
    %v1043 = vstv %s1042
    %v1044 = vmul.f32 %v1043, %v990
    %v1045 = vmul.f32 %v1043, %v991
    %v1046 = vadd.f32 %v1040, %v1044
    %v1047 = vadd.f32 %v1041, %v1045
    %s1048 = sld [smem:[#allocation3 + $0x16]]
    %v1049 = vstv %s1048
    %v1050 = vmul.f32 %v1049, %v930
    %v1051 = vmul.f32 %v1049, %v932
    %v1054 = vcombine.low %v1050, %v1051
    %v1056 = vunpack.c.l.s4 1966171168
    %v1057 = vunpack.c.0.s8 %v1056
    %v1058 = vlaneseq
    %v1059 = vshrl.u32 %v1058, 7
    %v1060 = vsub.s32 %v1057, %v1059
    %v1061 = vrot.slane %v1054, %v1060
    %v1062 = vcombine.high %v1061, %v1061
    %v1064 = vunpack.c.l.s4 1966171168
    %v1065 = vunpack.c.0.s8 %v1064
    %v1066 = vlaneseq
    %v1067 = vshrl.u32 %v1066, 7
    %v1068 = vsub.s32 %v1065, %v1067
    %v1069 = vrot.slane %v1061, %v1068
    %v1071 = vunpack.c.l.s4 1966171168
    %v1072 = vunpack.c.0.s8 %v1071
    %v1073 = vlaneseq
    %v1074 = vshrl.u32 %v1073, 7
    %v1075 = vsub.s32 %v1072, %v1074
    %v1076 = vrot.slane %v1062, %v1075
    %v1079 = vadd.f32 %v1046, %v1069
    %v1080 = vadd.f32 %v1047, %v1076
    %s1081 = sld [smem:[#allocation3 + $0x17]]
    %v1082 = vstv %s1081
    %v1083 = vmul.f32 %v1082, %v998
    %v1084 = vmul.f32 %v1082, %v999
    %v1085 = vadd.f32 %v1079, %v1083
    %v1086 = vadd.f32 %v1080, %v1084
    %s1087 = sld [smem:[#allocation3 + $0x18]]
    %v1088 = vstv %s1087
    %v1089 = vmul.f32 %v1088, %v1006
    %v1090 = vmul.f32 %v1088, %v1007
    %v1091 = vadd.f32 %v1085, %v1089
    %v1092 = vadd.f32 %v1086, %v1090
    %s1093 = sld [smem:[#allocation3 + $0x19]]
    %v1094 = vstv %s1093
    %v1095 = vmul.f32 %v1094, %v1014
    %v1096 = vmul.f32 %v1094, %v1015
    %v1097 = vadd.f32 %v1091, %v1095
    %v1098 = vadd.f32 %v1092, %v1096
    %s1099 = sld [smem:[#allocation3 + $0x1a]]
    %v1100 = vstv %s1099
    %v1101 = vmul.f32 %v1100, %v1022
    %v1102 = vmul.f32 %v1100, %v1023
    %v1103 = vadd.f32 %v1097, %v1101
    %v1104 = vadd.f32 %v1098, %v1102
    %s1105 = sld [smem:[#allocation3 + $0x36]]
    %v1106 = vstv %s1105
    %v1107 = vmul.f32 %v1106, %v966
    %v1108 = vmul.f32 %v1106, %v967
    %v1109 = vadd.f32 %v765, %v1107
    %v1110 = vadd.f32 %v766, %v1108
    %s1111 = sld [smem:[#allocation3 + $0x37]]
    %v1112 = vstv %s1111
    %v1113 = vmul.f32 %v1112, %v974
    %v1114 = vmul.f32 %v1112, %v975
    %v1115 = vadd.f32 %v1109, %v1113
    %v1116 = vadd.f32 %v1110, %v1114
    %s1117 = sld [smem:[#allocation3 + $0x38]]
    %v1118 = vstv %s1117
    %v1119 = vmul.f32 %v1118, %v982
    %v1120 = vmul.f32 %v1118, %v983
    %v1121 = vadd.f32 %v1115, %v1119
    %v1122 = vadd.f32 %v1116, %v1120
    %s1123 = sld [smem:[#allocation3 + $0x39]]
    %v1124 = vstv %s1123
    %v1125 = vmul.f32 %v1124, %v990
    %v1126 = vmul.f32 %v1124, %v991
    %v1127 = vadd.f32 %v1121, %v1125
    %v1128 = vadd.f32 %v1122, %v1126
    %s1129 = sld [smem:[#allocation3 + $0x3a]]
    %v1130 = vstv %s1129
    %v1131 = vmul.f32 %v1130, %v930
    %v1132 = vmul.f32 %v1130, %v932
    %v1135 = vcombine.low %v1131, %v1132
    %v1137 = vunpack.c.l.s4 1966171168
    %v1138 = vunpack.c.0.s8 %v1137
    %v1139 = vlaneseq
    %v1140 = vshrl.u32 %v1139, 7
    %v1141 = vsub.s32 %v1138, %v1140
    %v1142 = vrot.slane %v1135, %v1141
    %v1143 = vcombine.high %v1142, %v1142
    %v1145 = vunpack.c.l.s4 1966171168
    %v1146 = vunpack.c.0.s8 %v1145
    %v1147 = vlaneseq
    %v1148 = vshrl.u32 %v1147, 7
    %v1149 = vsub.s32 %v1146, %v1148
    %v1150 = vrot.slane %v1142, %v1149
    %v1152 = vunpack.c.l.s4 1966171168
    %v1153 = vunpack.c.0.s8 %v1152
    %v1154 = vlaneseq
    %v1155 = vshrl.u32 %v1154, 7
    %v1156 = vsub.s32 %v1153, %v1155
    %v1157 = vrot.slane %v1143, %v1156
    %v1160 = vadd.f32 %v1127, %v1150
    %v1161 = vadd.f32 %v1128, %v1157
    %s1162 = sld [smem:[#allocation3 + $0x3b]]
    %v1163 = vstv %s1162
    %v1164 = vmul.f32 %v1163, %v998
    %v1165 = vmul.f32 %v1163, %v999
    %v1166 = vadd.f32 %v1160, %v1164
    %v1167 = vadd.f32 %v1161, %v1165
    %s1168 = sld [smem:[#allocation3 + $0x3c]]
    %v1169 = vstv %s1168
    %v1170 = vmul.f32 %v1169, %v1006
    %v1171 = vmul.f32 %v1169, %v1007
    %v1172 = vadd.f32 %v1166, %v1170
    %v1173 = vadd.f32 %v1167, %v1171
    %s1174 = sld [smem:[#allocation3 + $0x3d]]
    %v1175 = vstv %s1174
    %v1176 = vmul.f32 %v1175, %v1014
    %v1177 = vmul.f32 %v1175, %v1015
    %v1178 = vadd.f32 %v1172, %v1176
    %v1179 = vadd.f32 %v1173, %v1177
    %s1180 = sld [smem:[#allocation3 + $0x3e]]
    %v1181 = vstv %s1180
    %v1182 = vmul.f32 %v1181, %v1022
    %v1183 = vmul.f32 %v1181, %v1023
    %v1184 = vadd.f32 %v1178, %v1182
    %v1185 = vadd.f32 %v1179, %v1183
    %s1186 = sld [smem:[#allocation3 + $0x5a]]
    %v1187 = vstv %s1186
    %v1188 = vmul.f32 %v1187, %v966
    %v1189 = vmul.f32 %v1187, %v967
    %v1190 = vadd.f32 %v846, %v1188
    %v1191 = vadd.f32 %v847, %v1189
    %s1192 = sld [smem:[#allocation3 + $0x5b]]
    %v1193 = vstv %s1192
    %v1194 = vmul.f32 %v1193, %v974
    %v1195 = vmul.f32 %v1193, %v975
    %v1196 = vadd.f32 %v1190, %v1194
    %v1197 = vadd.f32 %v1191, %v1195
    %s1198 = sld [smem:[#allocation3 + $0x5c]]
    %v1199 = vstv %s1198
    %v1200 = vmul.f32 %v1199, %v982
    %v1201 = vmul.f32 %v1199, %v983
    %v1202 = vadd.f32 %v1196, %v1200
    %v1203 = vadd.f32 %v1197, %v1201
    %s1204 = sld [smem:[#allocation3 + $0x5d]]
    %v1205 = vstv %s1204
    %v1206 = vmul.f32 %v1205, %v990
    %v1207 = vmul.f32 %v1205, %v991
    %v1208 = vadd.f32 %v1202, %v1206
    %v1209 = vadd.f32 %v1203, %v1207
    %s1210 = sld [smem:[#allocation3 + $0x5e]]
    %v1211 = vstv %s1210
    %v1212 = vmul.f32 %v1211, %v930
    %v1213 = vmul.f32 %v1211, %v932
    %v1216 = vcombine.low %v1212, %v1213
    %v1218 = vunpack.c.l.s4 1966171168
    %v1219 = vunpack.c.0.s8 %v1218
    %v1220 = vlaneseq
    %v1221 = vshrl.u32 %v1220, 7
    %v1222 = vsub.s32 %v1219, %v1221
    %v1223 = vrot.slane %v1216, %v1222
    %v1224 = vcombine.high %v1223, %v1223
    %v1226 = vunpack.c.l.s4 1966171168
    %v1227 = vunpack.c.0.s8 %v1226
    %v1228 = vlaneseq
    %v1229 = vshrl.u32 %v1228, 7
    %v1230 = vsub.s32 %v1227, %v1229
    %v1231 = vrot.slane %v1223, %v1230
    %v1233 = vunpack.c.l.s4 1966171168
    %v1234 = vunpack.c.0.s8 %v1233
    %v1235 = vlaneseq
    %v1236 = vshrl.u32 %v1235, 7
    %v1237 = vsub.s32 %v1234, %v1236
    %v1238 = vrot.slane %v1224, %v1237
    %v1241 = vadd.f32 %v1208, %v1231
    %v1242 = vadd.f32 %v1209, %v1238
    %s1243 = sld [smem:[#allocation3 + $0x5f]]
    %v1244 = vstv %s1243
    %v1245 = vmul.f32 %v1244, %v998
    %v1246 = vmul.f32 %v1244, %v999
    %v1247 = vadd.f32 %v1241, %v1245
    %v1248 = vadd.f32 %v1242, %v1246
    %s1249 = sld [smem:[#allocation3 + $0x60]]
    %v1250 = vstv %s1249
    %v1251 = vmul.f32 %v1250, %v1006
    %v1252 = vmul.f32 %v1250, %v1007
    %v1253 = vadd.f32 %v1247, %v1251
    %v1254 = vadd.f32 %v1248, %v1252
    %s1255 = sld [smem:[#allocation3 + $0x61]]
    %v1256 = vstv %s1255
    %v1257 = vmul.f32 %v1256, %v1014
    %v1258 = vmul.f32 %v1256, %v1015
    %v1259 = vadd.f32 %v1253, %v1257
    %v1260 = vadd.f32 %v1254, %v1258
    %s1261 = sld [smem:[#allocation3 + $0x62]]
    %v1262 = vstv %s1261
    %v1263 = vmul.f32 %v1262, %v1022
    %v1264 = vmul.f32 %v1262, %v1023
    %v1265 = vadd.f32 %v1259, %v1263
    %v1266 = vadd.f32 %v1260, %v1264
    %s1267 = sld [smem:[#allocation3 + $0x7e]]
    %v1268 = vstv %s1267
    %v1269 = vmul.f32 %v1268, %v966
    %v1270 = vmul.f32 %v1268, %v967
    %v1271 = vadd.f32 %v927, %v1269
    %v1272 = vadd.f32 %v928, %v1270
    %s1273 = sld [smem:[#allocation3 + $0x7f]]
    %v1274 = vstv %s1273
    %v1275 = vmul.f32 %v1274, %v974
    %v1276 = vmul.f32 %v1274, %v975
    %v1277 = vadd.f32 %v1271, %v1275
    %v1278 = vadd.f32 %v1272, %v1276
    %s1279 = sld [smem:[#allocation3 + $0x80]]
    %v1280 = vstv %s1279
    %v1281 = vmul.f32 %v1280, %v982
    %v1282 = vmul.f32 %v1280, %v983
    %v1283 = vadd.f32 %v1277, %v1281
    %v1284 = vadd.f32 %v1278, %v1282
    %s1285 = sld [smem:[#allocation3 + $0x81]]
    %v1286 = vstv %s1285
    %v1287 = vmul.f32 %v1286, %v990
    %v1288 = vmul.f32 %v1286, %v991
    %v1289 = vadd.f32 %v1283, %v1287
    %v1290 = vadd.f32 %v1284, %v1288
    %s1291 = sld [smem:[#allocation3 + $0x82]]
    %v1292 = vstv %s1291
    %v1293 = vmul.f32 %v1292, %v930
    %v1294 = vmul.f32 %v1292, %v932
    %v1297 = vcombine.low %v1293, %v1294
    %v1299 = vunpack.c.l.s4 1966171168
    %v1300 = vunpack.c.0.s8 %v1299
    %v1301 = vlaneseq
    %v1302 = vshrl.u32 %v1301, 7
    %v1303 = vsub.s32 %v1300, %v1302
    %v1304 = vrot.slane %v1297, %v1303
    %v1305 = vcombine.high %v1304, %v1304
    %v1307 = vunpack.c.l.s4 1966171168
    %v1308 = vunpack.c.0.s8 %v1307
    %v1309 = vlaneseq
    %v1310 = vshrl.u32 %v1309, 7
    %v1311 = vsub.s32 %v1308, %v1310
    %v1312 = vrot.slane %v1304, %v1311
    %v1314 = vunpack.c.l.s4 1966171168
    %v1315 = vunpack.c.0.s8 %v1314
    %v1316 = vlaneseq
    %v1317 = vshrl.u32 %v1316, 7
    %v1318 = vsub.s32 %v1315, %v1317
    %v1319 = vrot.slane %v1305, %v1318
    %v1322 = vadd.f32 %v1289, %v1312
    %v1323 = vadd.f32 %v1290, %v1319
    %s1324 = sld [smem:[#allocation3 + $0x83]]
    %v1325 = vstv %s1324
    %v1326 = vmul.f32 %v1325, %v998
    %v1327 = vmul.f32 %v1325, %v999
    %v1328 = vadd.f32 %v1322, %v1326
    %v1329 = vadd.f32 %v1323, %v1327
    %s1330 = sld [smem:[#allocation3 + $0x84]]
    %v1331 = vstv %s1330
    %v1332 = vmul.f32 %v1331, %v1006
    %v1333 = vmul.f32 %v1331, %v1007
    %v1334 = vadd.f32 %v1328, %v1332
    %v1335 = vadd.f32 %v1329, %v1333
    %s1336 = sld [smem:[#allocation3 + $0x85]]
    %v1337 = vstv %s1336
    %v1338 = vmul.f32 %v1337, %v1014
    %v1339 = vmul.f32 %v1337, %v1015
    %v1340 = vadd.f32 %v1334, %v1338
    %v1341 = vadd.f32 %v1335, %v1339
    %s1342 = sld [smem:[#allocation3 + $0x86]]
    %v1343 = vstv %s1342
    %v1344 = vmul.f32 %v1343, %v1022
    %v1345 = vmul.f32 %v1343, %v1023
    %v1346 = vadd.f32 %v1340, %v1344
    %v1347 = vadd.f32 %v1341, %v1345
    %s1348 = scalar_lea.vmem %s1, 3
    %v1349 = vld [vmem:[%s1348] ss:$4 sm:$0x3]
    %s1350 = scalar_lea.vmem %s1, 11
    %v1351 = vld [vmem:[%s1350] ss:$4 sm:$0x3]
    %v1354 = vcombine.low %v1349, %v1351
    %v1356 = vunpack.c.l.s4 1966171168
    %v1357 = vunpack.c.0.s8 %v1356
    %v1358 = vlaneseq
    %v1359 = vshrl.u32 %v1358, 7
    %v1360 = vsub.s32 %v1357, %v1359
    %v1361 = vrot.slane %v1354, %v1360
    %v1362 = vcombine.high %v1361, %v1361
    %v1364 = vunpack.c.l.s4 1966171168
    %v1365 = vunpack.c.0.s8 %v1364
    %v1366 = vlaneseq
    %v1367 = vshrl.u32 %v1366, 7
    %v1368 = vsub.s32 %v1365, %v1367
    %v1369 = vrot.slane %v1361, %v1368
    %v1371 = vunpack.c.l.s4 1966171168
    %v1372 = vunpack.c.0.s8 %v1371
    %v1373 = vlaneseq
    %v1374 = vshrl.u32 %v1373, 7
    %v1375 = vsub.s32 %v1372, %v1374
    %v1376 = vrot.slane %v1362, %v1375
    %1379 = vrot.lane.b32.xlu0 %v1369, 17
    %v1380 = vpop.permute.xlu0 %1379
    %1381 = vrot.lane.b32.xlu0 %v1376, 17
    %v1382 = vpop.permute.xlu0 %1381
    %v1383 = vsel %vm118, %v1380, %v1382
    %v1384 = vsel %vm118, %v1382, %v1380
    %v1385 = vmul.f32 %v1384, %v62
    %v1386 = vmul.f32 %v1383, %v63
    %1387 = vrot.lane.b32.xlu0 %v1369, 16
    %v1388 = vpop.permute.xlu0 %1387
    %1389 = vrot.lane.b32.xlu0 %v1376, 16
    %v1390 = vpop.permute.xlu0 %1389
    %v1391 = vsel %vm127, %v1388, %v1390
    %v1392 = vsel %vm127, %v1390, %v1388
    %v1393 = vmul.f32 %v1392, %v64
    %v1394 = vmul.f32 %v1391, %v65
    %1395 = vrot.lane.b32.xlu0 %v1369, 15
    %v1396 = vpop.permute.xlu0 %1395
    %1397 = vrot.lane.b32.xlu0 %v1376, 15
    %v1398 = vpop.permute.xlu0 %1397
    %v1399 = vsel %vm136, %v1396, %v1398
    %v1400 = vsel %vm136, %v1398, %v1396
    %v1401 = vmul.f32 %v1400, %v68
    %v1402 = vmul.f32 %v1399, %v69
    %1403 = vrot.lane.b32.xlu0 %v1369, 1
    %v1404 = vpop.permute.xlu0 %1403
    %1405 = vrot.lane.b32.xlu0 %v1376, 1
    %v1406 = vpop.permute.xlu0 %1405
    %v1407 = vsel %vm145, %v1404, %v1406
    %v1408 = vsel %vm145, %v1406, %v1404
    %v1409 = vmul.f32 %v1408, %v70
    %v1410 = vmul.f32 %v1407, %v71
    %1411 = vrot.lane.b32.xlu0 %v1369, 127
    %v1412 = vpop.permute.xlu0 %1411
    %1413 = vrot.lane.b32.xlu0 %v1376, 127
    %v1414 = vpop.permute.xlu0 %1413
    %v1415 = vsel %vm154, %v1412, %v1414
    %v1416 = vsel %vm154, %v1414, %v1412
    %v1417 = vmul.f32 %v1415, %v72
    %v1418 = vmul.f32 %v1416, %v73
    %1419 = vrot.lane.b32.xlu0 %v1369, 113
    %v1420 = vpop.permute.xlu0 %1419
    %1421 = vrot.lane.b32.xlu0 %v1376, 113
    %v1422 = vpop.permute.xlu0 %1421
    %v1423 = vsel %vm163, %v1420, %v1422
    %v1424 = vsel %vm163, %v1422, %v1420
    %v1425 = vmul.f32 %v1423, %v76
    %v1426 = vmul.f32 %v1424, %v77
    %1427 = vrot.lane.b32.xlu0 %v1369, 112
    %v1428 = vpop.permute.xlu0 %1427
    %1429 = vrot.lane.b32.xlu0 %v1376, 112
    %v1430 = vpop.permute.xlu0 %1429
    %v1431 = vsel %vm172, %v1428, %v1430
    %v1432 = vsel %vm172, %v1430, %v1428
    %v1433 = vmul.f32 %v1431, %v78
    %v1434 = vmul.f32 %v1432, %v79
    %1435 = vrot.lane.b32.xlu0 %v1369, 111
    %v1436 = vpop.permute.xlu0 %1435
    %1437 = vrot.lane.b32.xlu0 %v1376, 111
    %v1438 = vpop.permute.xlu0 %1437
    %v1439 = vsel %vm181, %v1436, %v1438
    %v1440 = vsel %vm181, %v1438, %v1436
    %v1441 = vmul.f32 %v1439, %v82
    %v1442 = vmul.f32 %v1440, %v83
    %s1443 = sld [smem:[#allocation3 + $0x1b]]
    %v1444 = vstv %s1443
    %v1445 = vmul.f32 %v1444, %v1385
    %v1446 = vmul.f32 %v1444, %v1386
    %v1447 = vadd.f32 %v1103, %v1445
    %v1448 = vadd.f32 %v1104, %v1446
    %s1449 = sld [smem:[#allocation3 + $0x1c]]
    %v1450 = vstv %s1449
    %v1451 = vmul.f32 %v1450, %v1393
    %v1452 = vmul.f32 %v1450, %v1394
    %v1453 = vadd.f32 %v1447, %v1451
    %v1454 = vadd.f32 %v1448, %v1452
    %s1455 = sld [smem:[#allocation3 + $0x1d]]
    %v1456 = vstv %s1455
    %v1457 = vmul.f32 %v1456, %v1401
    %v1458 = vmul.f32 %v1456, %v1402
    %v1459 = vadd.f32 %v1453, %v1457
    %v1460 = vadd.f32 %v1454, %v1458
    %s1461 = sld [smem:[#allocation3 + $0x1e]]
    %v1462 = vstv %s1461
    %v1463 = vmul.f32 %v1462, %v1409
    %v1464 = vmul.f32 %v1462, %v1410
    %v1465 = vadd.f32 %v1459, %v1463
    %v1466 = vadd.f32 %v1460, %v1464
    %s1467 = sld [smem:[#allocation3 + $0x1f]]
    %v1468 = vstv %s1467
    %v1469 = vmul.f32 %v1468, %v1349
    %v1470 = vmul.f32 %v1468, %v1351
    %v1473 = vcombine.low %v1469, %v1470
    %v1475 = vunpack.c.l.s4 1966171168
    %v1476 = vunpack.c.0.s8 %v1475
    %v1477 = vlaneseq
    %v1478 = vshrl.u32 %v1477, 7
    %v1479 = vsub.s32 %v1476, %v1478
    %v1480 = vrot.slane %v1473, %v1479
    %v1481 = vcombine.high %v1480, %v1480
    %v1483 = vunpack.c.l.s4 1966171168
    %v1484 = vunpack.c.0.s8 %v1483
    %v1485 = vlaneseq
    %v1486 = vshrl.u32 %v1485, 7
    %v1487 = vsub.s32 %v1484, %v1486
    %v1488 = vrot.slane %v1480, %v1487
    %v1490 = vunpack.c.l.s4 1966171168
    %v1491 = vunpack.c.0.s8 %v1490
    %v1492 = vlaneseq
    %v1493 = vshrl.u32 %v1492, 7
    %v1494 = vsub.s32 %v1491, %v1493
    %v1495 = vrot.slane %v1481, %v1494
    %v1498 = vadd.f32 %v1465, %v1488
    %v1499 = vadd.f32 %v1466, %v1495
    %s1500 = sld [smem:[#allocation3 + $0x20]]
    %v1501 = vstv %s1500
    %v1502 = vmul.f32 %v1501, %v1417
    %v1503 = vmul.f32 %v1501, %v1418
    %v1504 = vadd.f32 %v1498, %v1502
    %v1505 = vadd.f32 %v1499, %v1503
    %s1506 = sld [smem:[#allocation3 + $0x21]]
    %v1507 = vstv %s1506
    %v1508 = vmul.f32 %v1507, %v1425
    %v1509 = vmul.f32 %v1507, %v1426
    %v1510 = vadd.f32 %v1504, %v1508
    %v1511 = vadd.f32 %v1505, %v1509
    %s1512 = sld [smem:[#allocation3 + $0x22]]
    %v1513 = vstv %s1512
    %v1514 = vmul.f32 %v1513, %v1433
    %v1515 = vmul.f32 %v1513, %v1434
    %v1516 = vadd.f32 %v1510, %v1514
    %v1517 = vadd.f32 %v1511, %v1515
    %s1518 = sld [smem:[#allocation3 + $0x23]]
    %v1519 = vstv %s1518
    %v1520 = vmul.f32 %v1519, %v1441
    %v1521 = vmul.f32 %v1519, %v1442
    %v1522 = vadd.f32 %v1516, %v1520
    %v1523 = vadd.f32 %v1517, %v1521
    %s1524 = sld [smem:[#allocation3 + $0x3f]]
    %v1525 = vstv %s1524
    %v1526 = vmul.f32 %v1525, %v1385
    %v1527 = vmul.f32 %v1525, %v1386
    %v1528 = vadd.f32 %v1184, %v1526
    %v1529 = vadd.f32 %v1185, %v1527
    %s1530 = sld [smem:[#allocation3 + $0x40]]
    %v1531 = vstv %s1530
    %v1532 = vmul.f32 %v1531, %v1393
    %v1533 = vmul.f32 %v1531, %v1394
    %v1534 = vadd.f32 %v1528, %v1532
    %v1535 = vadd.f32 %v1529, %v1533
    %s1536 = sld [smem:[#allocation3 + $0x41]]
    %v1537 = vstv %s1536
    %v1538 = vmul.f32 %v1537, %v1401
    %v1539 = vmul.f32 %v1537, %v1402
    %v1540 = vadd.f32 %v1534, %v1538
    %v1541 = vadd.f32 %v1535, %v1539
    %s1542 = sld [smem:[#allocation3 + $0x42]]
    %v1543 = vstv %s1542
    %v1544 = vmul.f32 %v1543, %v1409
    %v1545 = vmul.f32 %v1543, %v1410
    %v1546 = vadd.f32 %v1540, %v1544
    %v1547 = vadd.f32 %v1541, %v1545
    %s1548 = sld [smem:[#allocation3 + $0x43]]
    %v1549 = vstv %s1548
    %v1550 = vmul.f32 %v1549, %v1349
    %v1551 = vmul.f32 %v1549, %v1351
    %v1554 = vcombine.low %v1550, %v1551
    %v1556 = vunpack.c.l.s4 1966171168
    %v1557 = vunpack.c.0.s8 %v1556
    %v1558 = vlaneseq
    %v1559 = vshrl.u32 %v1558, 7
    %v1560 = vsub.s32 %v1557, %v1559
    %v1561 = vrot.slane %v1554, %v1560
    %v1562 = vcombine.high %v1561, %v1561
    %v1564 = vunpack.c.l.s4 1966171168
    %v1565 = vunpack.c.0.s8 %v1564
    %v1566 = vlaneseq
    %v1567 = vshrl.u32 %v1566, 7
    %v1568 = vsub.s32 %v1565, %v1567
    %v1569 = vrot.slane %v1561, %v1568
    %v1571 = vunpack.c.l.s4 1966171168
    %v1572 = vunpack.c.0.s8 %v1571
    %v1573 = vlaneseq
    %v1574 = vshrl.u32 %v1573, 7
    %v1575 = vsub.s32 %v1572, %v1574
    %v1576 = vrot.slane %v1562, %v1575
    %v1579 = vadd.f32 %v1546, %v1569
    %v1580 = vadd.f32 %v1547, %v1576
    %s1581 = sld [smem:[#allocation3 + $0x44]]
    %v1582 = vstv %s1581
    %v1583 = vmul.f32 %v1582, %v1417
    %v1584 = vmul.f32 %v1582, %v1418
    %v1585 = vadd.f32 %v1579, %v1583
    %v1586 = vadd.f32 %v1580, %v1584
    %s1587 = sld [smem:[#allocation3 + $0x45]]
    %v1588 = vstv %s1587
    %v1589 = vmul.f32 %v1588, %v1425
    %v1590 = vmul.f32 %v1588, %v1426
    %v1591 = vadd.f32 %v1585, %v1589
    %v1592 = vadd.f32 %v1586, %v1590
    %s1593 = sld [smem:[#allocation3 + $0x46]]
    %v1594 = vstv %s1593
    %v1595 = vmul.f32 %v1594, %v1433
    %v1596 = vmul.f32 %v1594, %v1434
    %v1597 = vadd.f32 %v1591, %v1595
    %v1598 = vadd.f32 %v1592, %v1596
    %s1599 = sld [smem:[#allocation3 + $0x47]]
    %v1600 = vstv %s1599
    %v1601 = vmul.f32 %v1600, %v1441
    %v1602 = vmul.f32 %v1600, %v1442
    %v1603 = vadd.f32 %v1597, %v1601
    %v1604 = vadd.f32 %v1598, %v1602
    %s1605 = sld [smem:[#allocation3 + $0x63]]
    %v1606 = vstv %s1605
    %v1607 = vmul.f32 %v1606, %v1385
    %v1608 = vmul.f32 %v1606, %v1386
    %v1609 = vadd.f32 %v1265, %v1607
    %v1610 = vadd.f32 %v1266, %v1608
    %s1611 = sld [smem:[#allocation3 + $0x64]]
    %v1612 = vstv %s1611
    %v1613 = vmul.f32 %v1612, %v1393
    %v1614 = vmul.f32 %v1612, %v1394
    %v1615 = vadd.f32 %v1609, %v1613
    %v1616 = vadd.f32 %v1610, %v1614
    %s1617 = sld [smem:[#allocation3 + $0x65]]
    %v1618 = vstv %s1617
    %v1619 = vmul.f32 %v1618, %v1401
    %v1620 = vmul.f32 %v1618, %v1402
    %v1621 = vadd.f32 %v1615, %v1619
    %v1622 = vadd.f32 %v1616, %v1620
    %s1623 = sld [smem:[#allocation3 + $0x66]]
    %v1624 = vstv %s1623
    %v1625 = vmul.f32 %v1624, %v1409
    %v1626 = vmul.f32 %v1624, %v1410
    %v1627 = vadd.f32 %v1621, %v1625
    %v1628 = vadd.f32 %v1622, %v1626
    %s1629 = sld [smem:[#allocation3 + $0x67]]
    %v1630 = vstv %s1629
    %v1631 = vmul.f32 %v1630, %v1349
    %v1632 = vmul.f32 %v1630, %v1351
    %v1635 = vcombine.low %v1631, %v1632
    %v1637 = vunpack.c.l.s4 1966171168
    %v1638 = vunpack.c.0.s8 %v1637
    %v1639 = vlaneseq
    %v1640 = vshrl.u32 %v1639, 7
    %v1641 = vsub.s32 %v1638, %v1640
    %v1642 = vrot.slane %v1635, %v1641
    %v1643 = vcombine.high %v1642, %v1642
    %v1645 = vunpack.c.l.s4 1966171168
    %v1646 = vunpack.c.0.s8 %v1645
    %v1647 = vlaneseq
    %v1648 = vshrl.u32 %v1647, 7
    %v1649 = vsub.s32 %v1646, %v1648
    %v1650 = vrot.slane %v1642, %v1649
    %v1652 = vunpack.c.l.s4 1966171168
    %v1653 = vunpack.c.0.s8 %v1652
    %v1654 = vlaneseq
    %v1655 = vshrl.u32 %v1654, 7
    %v1656 = vsub.s32 %v1653, %v1655
    %v1657 = vrot.slane %v1643, %v1656
    %v1660 = vadd.f32 %v1627, %v1650
    %v1661 = vadd.f32 %v1628, %v1657
    %s1662 = sld [smem:[#allocation3 + $0x68]]
    %v1663 = vstv %s1662
    %v1664 = vmul.f32 %v1663, %v1417
    %v1665 = vmul.f32 %v1663, %v1418
    %v1666 = vadd.f32 %v1660, %v1664
    %v1667 = vadd.f32 %v1661, %v1665
    %s1668 = sld [smem:[#allocation3 + $0x69]]
    %v1669 = vstv %s1668
    %v1670 = vmul.f32 %v1669, %v1425
    %v1671 = vmul.f32 %v1669, %v1426
    %v1672 = vadd.f32 %v1666, %v1670
    %v1673 = vadd.f32 %v1667, %v1671
    %s1674 = sld [smem:[#allocation3 + $0x6a]]
    %v1675 = vstv %s1674
    %v1676 = vmul.f32 %v1675, %v1433
    %v1677 = vmul.f32 %v1675, %v1434
    %v1678 = vadd.f32 %v1672, %v1676
    %v1679 = vadd.f32 %v1673, %v1677
    %s1680 = sld [smem:[#allocation3 + $0x6b]]
    %v1681 = vstv %s1680
    %v1682 = vmul.f32 %v1681, %v1441
    %v1683 = vmul.f32 %v1681, %v1442
    %v1684 = vadd.f32 %v1678, %v1682
    %v1685 = vadd.f32 %v1679, %v1683
    %s1686 = sld [smem:[#allocation3 + $0x87]]
    %v1687 = vstv %s1686
    %v1688 = vmul.f32 %v1687, %v1385
    %v1689 = vmul.f32 %v1687, %v1386
    %v1690 = vadd.f32 %v1346, %v1688
    %v1691 = vadd.f32 %v1347, %v1689
    %s1692 = sld [smem:[#allocation3 + $0x88]]
    %v1693 = vstv %s1692
    %v1694 = vmul.f32 %v1693, %v1393
    %v1695 = vmul.f32 %v1693, %v1394
    %v1696 = vadd.f32 %v1690, %v1694
    %v1697 = vadd.f32 %v1691, %v1695
    %s1698 = sld [smem:[#allocation3 + $0x89]]
    %v1699 = vstv %s1698
    %v1700 = vmul.f32 %v1699, %v1401
    %v1701 = vmul.f32 %v1699, %v1402
    %v1702 = vadd.f32 %v1696, %v1700
    %v1703 = vadd.f32 %v1697, %v1701
    %s1704 = sld [smem:[#allocation3 + $0x8a]]
    %v1705 = vstv %s1704
    %v1706 = vmul.f32 %v1705, %v1409
    %v1707 = vmul.f32 %v1705, %v1410
    %v1708 = vadd.f32 %v1702, %v1706
    %v1709 = vadd.f32 %v1703, %v1707
    %s1710 = sld [smem:[#allocation3 + $0x8b]]
    %v1711 = vstv %s1710
    %v1712 = vmul.f32 %v1711, %v1349
    %v1713 = vmul.f32 %v1711, %v1351
    %v1716 = vcombine.low %v1712, %v1713
    %v1718 = vunpack.c.l.s4 1966171168
    %v1719 = vunpack.c.0.s8 %v1718
    %v1720 = vlaneseq
    %v1721 = vshrl.u32 %v1720, 7
    %v1722 = vsub.s32 %v1719, %v1721
    %v1723 = vrot.slane %v1716, %v1722
    %v1724 = vcombine.high %v1723, %v1723
    %v1726 = vunpack.c.l.s4 1966171168
    %v1727 = vunpack.c.0.s8 %v1726
    %v1728 = vlaneseq
    %v1729 = vshrl.u32 %v1728, 7
    %v1730 = vsub.s32 %v1727, %v1729
    %v1731 = vrot.slane %v1723, %v1730
    %v1733 = vunpack.c.l.s4 1966171168
    %v1734 = vunpack.c.0.s8 %v1733
    %v1735 = vlaneseq
    %v1736 = vshrl.u32 %v1735, 7
    %v1737 = vsub.s32 %v1734, %v1736
    %v1738 = vrot.slane %v1724, %v1737
    %v1741 = vadd.f32 %v1708, %v1731
    %v1742 = vadd.f32 %v1709, %v1738
    %s1743 = sld [smem:[#allocation3 + $0x8c]]
    %v1744 = vstv %s1743
    %v1745 = vmul.f32 %v1744, %v1417
    %v1746 = vmul.f32 %v1744, %v1418
    %v1747 = vadd.f32 %v1741, %v1745
    %v1748 = vadd.f32 %v1742, %v1746
    %s1749 = sld [smem:[#allocation3 + $0x8d]]
    %v1750 = vstv %s1749
    %v1751 = vmul.f32 %v1750, %v1425
    %v1752 = vmul.f32 %v1750, %v1426
    %v1753 = vadd.f32 %v1747, %v1751
    %v1754 = vadd.f32 %v1748, %v1752
    %s1755 = sld [smem:[#allocation3 + $0x8e]]
    %v1756 = vstv %s1755
    %v1757 = vmul.f32 %v1756, %v1433
    %v1758 = vmul.f32 %v1756, %v1434
    %v1759 = vadd.f32 %v1753, %v1757
    %v1760 = vadd.f32 %v1754, %v1758
    %s1761 = sld [smem:[#allocation3 + $0x8f]]
    %v1762 = vstv %s1761
    %v1763 = vmul.f32 %v1762, %v1441
    %v1764 = vmul.f32 %v1762, %v1442
    %v1765 = vadd.f32 %v1759, %v1763
    %v1766 = vadd.f32 %v1760, %v1764
    %v1767 = vand.u32 2147483647, %v1522
    %v1768 = vand.u32 2147483647, %v1523
    %v1769 = vand.u32 2147483647, %v1603
    %v1770 = vand.u32 2147483647, %v1604
    %v1771 = vadd.f32 %v1767, %v1769
    %v1772 = vadd.f32 %v1768, %v1770
    %v1773 = vand.u32 2147483647, %v1684
    %v1774 = vand.u32 2147483647, %v1685
    %v1775 = vadd.f32 %v1771, %v1773
    %v1776 = vadd.f32 %v1772, %v1774
    %v1777 = vand.u32 2147483647, %v1765
    %v1778 = vand.u32 2147483647, %v1766
    %v1779 = vadd.f32 %v1775, %v1777
    %v1780 = vadd.f32 %v1776, %v1778
    %p1781 = scmp.eq.s32.totalorder 0, 0
    // Predicated region
    $region14: #{geo_loss.1} parent=1 // pred_check
      %p1782 = pneg %p1781
    $region15: #{geo_loss.1} parent=1 // pred_check_branch
      %1784 = sbr.rel (%p1782) target = $region17
    $region16: #{geo_loss.1} parent=1 // pred_region
      %1785 = vst [vmem:[#allocation2] sm:$0xf] 0.0
      %s1786 = scalar_lea.smem [#allocation6], 0
      %1787 = sst [smem:[%s1786]] 0.0
    $region17: #{geo_loss.1} parent=1 // pred_fallthru
      _
    %v1788 = vld [vmem:[#allocation2] sm:$0xf]
    %v1791 = vcombine.low %v1779, %v1780
    %v1793 = vunpack.c.l.s4 1983009808
    %v1794 = vunpack.c.0.s8 %v1793
    %v1795 = vlaneseq
    %v1796 = vshrl.u32 %v1795, 7
    %v1797 = vsub.s32 %v1794, %v1796
    %v1798 = vrot.slane %v1791, %v1797
    %v1800 = vadd.f32 %v1788, %v1798
    %1801 = vst [vmem:[#allocation2] sm:$0xf] %v1800
    // Predicated region
    $region18: #{geo_loss.1} parent=1 // pred_check
      %p1802 = pneg %p1781
    $region19: #{geo_loss.1} parent=1 // pred_check_branch
      %1804 = sbr.rel (%p1802) target = $region21
    $region20: #{geo_loss.1} parent=1 // pred_region
      %v1805 = vld [vmem:[#allocation2] sm:$0xf]
      %v1808 = vunpack.c.l.s4 1983009808
      %v1809 = vunpack.c.0.s8 %v1808
      %v1810 = vlaneseq
      %v1811 = vshrl.u32 %v1810, 7
      %v1812 = vsub.s32 %v1809, %v1811
      %v1813 = vrot.slane %v1805, %v1812
      %v1814 = vcombine.high %v1813, %v1813
      %vm1817 = vcmask 1041408
      %v1818 = vsel %vm1817, %v1813, 0.0
      %v1819 = vsel %vm1817, %v1814, 0.0
      %v1820 = vadd.f32 %v1818, %v1819
      %1821 = vadd.xlane.f32.xlu0 %v1820
      %v1822 = vpop.xlane.xlu0 %1821
      %v1823 = vrot.slane %v1822, 4
      %v1824 = vadd.f32 %v1822, %v1823
      %v1825 = vrot.slane %v1824, 2
      %v1826 = vadd.f32 %v1824, %v1825
      %v1827 = vrot.slane %v1826, 1
      %v1828 = vadd.f32 %v1826, %v1827
      %s1829 = vtos %v1828
      %s1830 = smul.f32 %s1829, 0.00048828125
      %s1831 = scalar_lea.smem [#allocation6], 0
      %1832 = sst [smem:[%s1831]] %s1830
    $region21: #{geo_loss.1} parent=1 // pred_fallthru
      _
    // Predicated region
    $region22: #{geo_loss.1} parent=1 // pred_check
      _
    $region23: #{geo_loss.1} parent=1 // pred_check_branch
      %1834 = sbr.rel (0) target = $region25
    $region24: #{geo_loss.1} parent=1 // pred_region
      %s1836 = ssub.s32 16, 16
      %1837 = vsyncadd [#allocation4], %s1836
      %1840 = dma.smem_to_hbm [#allocation6], 16, %s2, [#allocation4]
    $region25: #{geo_loss.1} parent=1 // pred_fallthru
      _
    // Predicated region
    $region26: #{geo_loss.1} parent=1 // pred_check
      _
    $region27: #{geo_loss.1} parent=1 // pred_check_branch
      %1842 = sbr.rel (0) target = $region29
    $region28: #{geo_loss.1} parent=1 // pred_region
      %1843 = dma.done [#allocation4], 16
    $region29: #{geo_loss.1} parent=1 // pred_fallthru
      _
    %1844 = sfence
    %1845 = vsyncpa [#allocation4], 1
    %1846 = vsyncpa [#allocation5], 1

</llo_original>
